<compile_context>
chip_gen: v5e
topology: v5e:2x2
jax: 0.10.0
libtpu: 0.0.40
codegen_flags: <defaults>
</compile_context>

<pallas_src>
import functools
import math

import jax
import jax.numpy as jnp
from jax.experimental import pallas as pl
from jax.experimental.pallas import tpu as pltpu


def _round_up(x, m):
    return ((x + m - 1) // m) * m


def _const_block_spec(block_shape, index_map):
    """BlockSpec for a grid-invariant operand: single-buffered if supported."""
    try:
        return pl.BlockSpec(block_shape, index_map,
                            pipeline_mode=pl.Buffered(1))
    except (AttributeError, TypeError):
        # Older Pallas without pipeline_mode / Buffered: fall back to default
        # (double-buffered) behaviour, which is still correct.
        return pl.BlockSpec(block_shape, index_map)


# ---------------------------------------------------------------------------
# Pallas kernel: GRU recurrence over one (batch block, time chunk) tile.
# ---------------------------------------------------------------------------
def _gru_chunk_kernel(gi_ref, whh_ref, bhn_ref, out_ref, h_scratch):
    """
    gi_ref   : (Tc, Bb, 3*Hp) bf16  precomputed x@Wih^T + (bih + [b_hr,b_hz,0])
    whh_ref  : (Hp, 3*Hp)     bf16  recurrent weights (transposed, gate-padded)
    bhn_ref  : (1, Hp)        f32   n-gate recurrent bias (stays inside r*(...))
    out_ref  : (Tc, Bb, Hp)   bf16
    h_scratch: (Bb, Hp)       f32   hidden state carried across time chunks
    """
    tc = pl.program_id(1)          # time-chunk index (innermost, "arbitrary")

    @pl.when(tc == 0)
    def _():
        # nn.GRU default: zero initial hidden state.
        h_scratch[...] = jnp.zeros_like(h_scratch)

    whh = whh_ref[...]             # (Hp, 3Hp) -- hoisted out of the time loop
    Bb, Hp = h_scratch.shape
    # Hoisted: JAX does not CSE broadcast_in_dim, so broadcast once per chunk.
    bhn = jnp.broadcast_to(bhn_ref[...], (Bb, Hp))
    n_steps = gi_ref.shape[0]

    # TODO(synk): optionally split the recurrent dot into rz / n halves so the
    # sigmoids (EUP) overlap the n-gate matmul; verify with a bundle dump.
    def step(i, h):
        gi = gi_ref[i].astype(jnp.float32)                         # (Bb, 3Hp)
        # bf16 x bf16 -> f32 MXU matmul; gate math stays in f32.
        gh = jnp.dot(h.astype(jnp.bfloat16), whh,
                     preferred_element_type=jnp.float32)           # (Bb, 3Hp)
        # Gate slices are 128-lane aligned (each gate block is Hp wide).
        r = jax.nn.sigmoid(gi[:, 0:Hp] + gh[:, 0:Hp])
        z = jax.nn.sigmoid(gi[:, Hp:2 * Hp] + gh[:, Hp:2 * Hp])
        n = jnp.tanh(gi[:, 2 * Hp:3 * Hp] + r * (gh[:, 2 * Hp:3 * Hp] + bhn))
        h_new = (1.0 - z) * n + z * h
        out_ref[i] = h_new.astype(out_ref.dtype)                   # lane-dense
        return h_new

    # Bounded partial unroll: keeps LLO scheduling visibility without keeping
    # time_chunk copies of gi/gh/r/z/n live (64 vregs total).
    h_last = jax.lax.fori_loop(0, n_steps, step, h_scratch[...],
                               unroll=min(n_steps, 8))
    h_scratch[...] = h_last


def _gru_recurrence(gi, whh_t_pad, bhn_pad, *, time_chunk, batch_block):
    """Run the sequential GRU recurrence over a precomputed input projection."""
    T, Bp, three_hp = gi.shape
    Hp = three_hp // 3
    nt = T // time_chunk
    nb = Bp // batch_block
    # NOTE: the h_scratch carry across time chunks is only correct because the
    # time axis is the innermost grid axis and is marked "arbitrary"
    # (sequential). Do not reorder the grid or mark it "parallel".
    return pl.pallas_call(
        _gru_chunk_kernel,
        out_shape=jax.ShapeDtypeStruct((T, Bp, Hp), jnp.bfloat16),
        grid=(nb, nt),
        in_specs=[
            pl.BlockSpec((time_chunk, batch_block, 3 * Hp),
                         lambda b, t: (t, b, 0)),
            # Grid-invariant weight / bias blocks: single-buffered so Whh is
            # not double-buffered (matters on v7x's 64 MiB/TC VMEM).
            _const_block_spec((Hp, 3 * Hp), lambda b, t: (0, 0)),
            _const_block_spec((1, Hp), lambda b, t: (0, 0)),
        ],
        out_specs=pl.BlockSpec((time_chunk, batch_block, Hp),
                               lambda b, t: (t, b, 0)),
        scratch_shapes=[pltpu.VMEM((batch_block, Hp), jnp.float32)],
        compiler_params=pltpu.CompilerParams(
            dimension_semantics=("parallel", "arbitrary"),
            # Above the 16/32 MiB scoped defaults, below every generation's
            # physical VMEM (64 MiB/TC on v7x).  Re-derive time_chunk /
            # batch_block so 2*gi + 2*out blocks + Whh + scratch fit.
            vmem_limit_bytes=48 * 1024 * 1024),
    )(gi, whh_t_pad, bhn_pad)


# ---------------------------------------------------------------------------
# Parameters (PyTorch-style init) + kernel-friendly padded bf16 layouts.
# ---------------------------------------------------------------------------
def _pad_gate_blocks(a, H, Hp):
    """(..., 3H) -> (..., 3Hp): zero-pad each (r, z, n) gate block to width Hp."""
    parts = []
    for g in range(3):
        blk = a[..., g * H:(g + 1) * H]
        pad = [(0, 0)] * (a.ndim - 1) + [(0, Hp - H)]
        parts.append(jnp.pad(blk, pad))
    return jnp.concatenate(parts, axis=-1)


def init_encoder_rnn_params(key, input_size, hidden_size, num_layers):
    """Mimics PyTorch GRU init: uniform(-1/sqrt(H), 1/sqrt(H))."""
    H = hidden_size
    Hp = max(_round_up(H, 128), 128)          # lane-dense hidden dim
    bound = 1.0 / math.sqrt(H)
    params = []
    for layer in range(num_layers):
        in_sz = input_size if layer == 0 else H
        key, k1, k2, k3, k4 = jax.random.split(key, 5)
        wih = jax.random.uniform(k1, (3 * H, in_sz), jnp.float32, -bound, bound)
        whh = jax.random.uniform(k2, (3 * H, H), jnp.float32, -bound, bound)
        bih = jax.random.uniform(k3, (3 * H,), jnp.float32, -bound, bound)
        bhh = jax.random.uniform(k4, (3 * H,), jnp.float32, -bound, bound)

        # Derived layouts used by the kernels -------------------------------
        wih_t_pad = _pad_gate_blocks(wih.T, H, Hp)                 # (in, 3Hp)
        if layer > 0:
            # Pad the input rows to Hp so layers >= 1 consume the previous
            # layer's (T, B, Hp) output directly (lane-dense layer chaining).
            wih_t_pad = jnp.pad(wih_t_pad, ((0, Hp - H), (0, 0)))  # (Hp, 3Hp)
        whh_t_pad = jnp.pad(_pad_gate_blocks(whh.T, H, Hp),
                            ((0, Hp - H), (0, 0)))                 # (Hp, 3Hp)
        # Fold bih + (b_hr, b_hz) into the hoisted projection; keep b_hn apart
        # (it must sit inside r * (...)).
        b_fold = _pad_gate_blocks(
            jnp.concatenate([bih[:2 * H] + bhh[:2 * H], bih[2 * H:]]), H, Hp)
        bhn_pad = jnp.pad(bhh[2 * H:], (0, Hp - H)).reshape(1, Hp)

        params.append(dict(
            wih=wih, whh=whh, bih=bih, bhh=bhh,          # for the reference
            wih_t_pad=wih_t_pad.astype(jnp.bfloat16),    # bf16 MXU operands
            whh_t_pad=whh_t_pad.astype(jnp.bfloat16),
            b_fold=b_fold,                               # f32 (folded biases)
            bhn_pad=bhn_pad,                             # f32
        ))
    # TODO(synk): nn.BatchNorm1d(1, 500) is constructed in __init__ but never
    # used in forward(), so it is intentionally not implemented.
    return params


# ---------------------------------------------------------------------------
# Forward pass (matches r_out, h_n = nn.GRU(...)(x) with zero initial state).
# ---------------------------------------------------------------------------
@functools.partial(jax.jit,
                   static_argnames=("hidden_size", "time_chunk", "batch_block"))
def encoder_rnn_forward(x, params, hidden_size, time_chunk, batch_block):
    H = hidden_size
    T, B, _ = x.shape
    assert batch_block % 8 == 0, "batch_block must be sublane-aligned (x8)"
    assert T % time_chunk == 0, "seq_len must be divisible by time_chunk"
    # Pad the batch to a multiple of batch_block (>= 8 sublanes) so all kernel
    # stores are unmasked; padded rows are independent and dropped at the end.
    Bp = _round_up(B, batch_block)
    if Bp != B:
        x = jnp.pad(x, ((0, 0), (0, Bp - B), (0, 0)))

    layer_in = x.astype(jnp.bfloat16)           # bf16 GEMM operand
    h_last = []
    for p in params:
        in_sz = layer_in.shape[-1]
        # Hoisted input projection: one MXU-friendly bf16 GEMM over all T*Bp
        # rows with (bih + b_hr/b_hz) folded in; gi is emitted bf16 to halve
        # its HBM write+read and the kernel's double-buffer VMEM footprint.
        gi = (jnp.dot(layer_in.reshape(T * Bp, in_sz), p["wih_t_pad"],
                      preferred_element_type=jnp.float32)
              + p["b_fold"]).astype(jnp.bfloat16).reshape(T, Bp, -1)
        r_out_pad = _gru_recurrence(gi, p["whh_t_pad"], p["bhn_pad"],
                                    time_chunk=time_chunk,
                                    batch_block=batch_block)  # (T,Bp,Hp) bf16
        h_last.append(r_out_pad[-1])
        # Lane-dense layer chaining: feed the padded (T, Bp, Hp) output
        # straight into the next layer's hoisted GEMM; slice only at the end.
        layer_in = r_out_pad
        # TODO(synk): fuse the next layer's input projection into the Pallas
        # kernel (compute gi per time chunk in VMEM) to eliminate the gi HBM
        # round trip entirely.
    r_out = layer_in[:, :B, :H].astype(jnp.float32)
    h_n = jnp.stack(h_last, axis=0)[:, :B, :H].astype(jnp.float32)
    return r_out, h_n


# ---------------------------------------------------------------------------
# Pure-JAX reference (faithful PyTorch GRU math, f32 activations) for checking.
# Uses the same bf16-rounded weights as the kernel path so only activation
# rounding differs; tolerance is loosened accordingly (bf16 ~0.4% relative).
# ---------------------------------------------------------------------------
def _gru_reference(x, params, hidden_size):
    T, B, _ = x.shape
    Hd = hidden_size
    layer_in = x
    h_n_layers = []
    for p in params:
        wih = p["wih"].astype(jnp.bfloat16).astype(jnp.float32)
        whh = p["whh"].astype(jnp.bfloat16).astype(jnp.float32)
        bih, bhh = p["bih"], p["bhh"]
        h = jnp.zeros((B, Hd), jnp.float32)
        outs = []
        for t in range(T):
            gi = layer_in[t] @ wih.T + bih
            gh = h @ whh.T + bhh
            r = jax.nn.sigmoid(gi[:, :Hd] + gh[:, :Hd])
            z = jax.nn.sigmoid(gi[:, Hd:2 * Hd] + gh[:, Hd:2 * Hd])
            n = jnp.tanh(gi[:, 2 * Hd:] + r * gh[:, 2 * Hd:])
            h = (1.0 - z) * n + z * h
            outs.append(h)
        layer_in = jnp.stack(outs, axis=0)
        h_n_layers.append(h)
    return layer_in, jnp.stack(h_n_layers, axis=0)


if __name__ == "__main__":
    seq_len, batch, input_size, hidden_size, num_layers = 8, 2, 16, 32, 2
    # time_chunk=4 -> grid=(1, 2): exercises the cross-chunk hidden-state carry.
    # batch_block=8: batch padded 2 -> 8 so stores are sublane-unmasked.
    time_chunk, batch_block = 4, 8

    key = jax.random.PRNGKey(0)
    key_x, key_p = jax.random.split(key)
    x = jax.random.normal(key_x, (seq_len, batch, input_size), jnp.float32)
    params = init_encoder_rnn_params(key_p, input_size, hidden_size, num_layers)

    r_out, h_n = encoder_rnn_forward(x, params, hidden_size,
                                     time_chunk, batch_block)
    jax.block_until_ready((r_out, h_n))

    r_ref, h_ref = _gru_reference(x, params, hidden_size)
    assert r_out.shape == (seq_len, batch, hidden_size)
    assert h_n.shape == (num_layers, batch, hidden_size)
    # bf16 gi / h-for-dot / output rounding vs f32 reference -> loose tolerance.
    assert jnp.allclose(r_out, r_ref, atol=5e-2, rtol=5e-2), (
        "max |diff| =", float(jnp.max(jnp.abs(r_out - r_ref))))
    assert jnp.allclose(h_n, h_ref, atol=5e-2, rtol=5e-2), (
        "max |diff| =", float(jnp.max(jnp.abs(h_n - h_ref))))

    print("KERNEL_OK")
</pallas_src>

<mosaic_0001>
module attributes {stable_mosaic.version = 11 : i64} {
  func.func @_gru_chunk_kernel(%arg0: i32, %arg1: i32, %arg2: memref<4x8x384xbf16, #tpu.memory_space<vmem>>, %arg3: memref<128x384xbf16, #tpu.memory_space<vmem>>, %arg4: memref<1x128xf32, #tpu.memory_space<vmem>>, %arg5: memref<4x8x128xbf16, #tpu.memory_space<vmem>>, %arg6: memref<8x128xf32, #tpu.memory_space<vmem>>) attributes {dimension_semantics = [#tpu.dimension_semantics<parallel>, #tpu.dimension_semantics<arbitrary>], iteration_bounds = array<i64: 1, 2>, scalar_prefetch = 0 : i64, scratch_operands = 1 : i64, tpu.core_type = #tpu.core_type<tc>, window_params = [{transform_indices = @transform_0, window_bounds = array<i64: 4, 8, 384>}, {pipeline_mode = #tpu.pipeline_mode<synchronous>, transform_indices = @transform_1, window_bounds = array<i64: 128, 384>}, {pipeline_mode = #tpu.pipeline_mode<synchronous>, transform_indices = @transform_2, window_bounds = array<i64: 1, 128>}, {transform_indices = @transform_3, window_bounds = array<i64: 4, 8, 128>}]} {
    %c0_i32 = arith.constant 0 : i32
    %0 = arith.cmpi eq, %arg1, %c0_i32 : i32
    %1 = arith.extui %0 : i1 to i32
    %c0_i32_0 = arith.constant 0 : i32
    %2 = arith.cmpi ne, %1, %c0_i32_0 : i32
    scf.if %2 {
      %cst_40 = arith.constant 0.000000e+00 : f32
      %161 = vector.broadcast %cst_40 : f32 to vector<8x128xf32>
      %c0_41 = arith.constant 0 : index
      %c0_42 = arith.constant 0 : index
      %162 = vector.load %arg6[%c0_41, %c0_42] : memref<8x128xf32, #tpu.memory_space<vmem>>, vector<8x128xf32>
      tpu.vector_store %arg6[%c0_41, %c0_42], %161 {strides = array<i32>} : memref<8x128xf32, #tpu.memory_space<vmem>>, vector<8x128xf32>,
    } else {
    }
    %c0 = arith.constant 0 : index
    %c0_1 = arith.constant 0 : index
    %3 = vector.load %arg3[%c0, %c0_1] : memref<128x384xbf16, #tpu.memory_space<vmem>>, vector<128x384xbf16>
    %c0_2 = arith.constant 0 : index
    %c0_3 = arith.constant 0 : index
    %4 = vector.load %arg4[%c0_2, %c0_3] : memref<1x128xf32, #tpu.memory_space<vmem>>, vector<1x128xf32>
    %5 = vector.shape_cast %4 : vector<1x128xf32> to vector<1x128xf32>
    %6 = vector.broadcast %5 : vector<1x128xf32> to vector<8x128xf32>
    %c0_4 = arith.constant 0 : index
    %c0_5 = arith.constant 0 : index
    %7 = vector.load %arg6[%c0_4, %c0_5] : memref<8x128xf32, #tpu.memory_space<vmem>>, vector<8x128xf32>
    %c0_i32_6 = arith.constant 0 : i32
    %8 = arith.index_cast %c0_i32_6 : i32 to index
    %c0_7 = arith.constant 0 : index
    %c0_8 = arith.constant 0 : index
    %9 = vector.load %arg2[%8, %c0_7, %c0_8] : memref<4x8x384xbf16, #tpu.memory_space<vmem>>, vector<1x8x384xbf16>
    %10 = vector.shape_cast %9 : vector<1x8x384xbf16> to vector<8x384xbf16>
    %11 = arith.extf %10 : vector<8x384xbf16> to vector<8x384xf32>
    %12 = arith.truncf %7 : vector<8x128xf32> to vector<8x128xbf16>
    %cst = arith.constant dense<0.000000e+00> : vector<8x384xf32>
    %13 = tpu.matmul %12, %3, %cst {dimension_numbers = #tpu.dot_dimension_numbers<[1], [0], [0], [1], [0, 0, 1, 1], [], []>} : vector<8x128xbf16>, vector<128x384xbf16>, vector<8x384xf32> -> vector<8x384xf32>
    %14 = vector.extract_strided_slice %11 {offsets = [0, 0], sizes = [8, 128], strides = [1, 1]} : vector<8x384xf32> to vector<8x128xf32>
    %15 = vector.extract_strided_slice %13 {offsets = [0, 0], sizes = [8, 128], strides = [1, 1]} : vector<8x384xf32> to vector<8x128xf32>
    %16 = arith.addf %14, %15 : vector<8x128xf32>
    %17 = arith.negf %16 : vector<8x128xf32>
    %18 = math.exp %17 : vector<8x128xf32>
    %cst_9 = arith.constant 1.000000e+00 : f32
    %19 = vector.broadcast %cst_9 : f32 to vector<8x128xf32>
    %20 = arith.addf %19, %18 : vector<8x128xf32>
    %21 = arith.divf %19, %20 : vector<8x128xf32>
    %22 = vector.extract_strided_slice %11 {offsets = [0, 128], sizes = [8, 128], strides = [1, 1]} : vector<8x384xf32> to vector<8x128xf32>
    %23 = vector.extract_strided_slice %13 {offsets = [0, 128], sizes = [8, 128], strides = [1, 1]} : vector<8x384xf32> to vector<8x128xf32>
    %24 = arith.addf %22, %23 : vector<8x128xf32>
    %25 = arith.negf %24 : vector<8x128xf32>
    %26 = math.exp %25 : vector<8x128xf32>
    %cst_10 = arith.constant 1.000000e+00 : f32
    %27 = vector.broadcast %cst_10 : f32 to vector<8x128xf32>
    %28 = arith.addf %27, %26 : vector<8x128xf32>
    %29 = arith.divf %27, %28 : vector<8x128xf32>
    %30 = vector.extract_strided_slice %11 {offsets = [0, 256], sizes = [8, 128], strides = [1, 1]} : vector<8x384xf32> to vector<8x128xf32>
    %31 = vector.extract_strided_slice %13 {offsets = [0, 256], sizes = [8, 128], strides = [1, 1]} : vector<8x384xf32> to vector<8x128xf32>
    %32 = arith.addf %31, %6 : vector<8x128xf32>
    %33 = arith.mulf %21, %32 : vector<8x128xf32>
    %34 = arith.addf %30, %33 : vector<8x128xf32>
    %35 = math.tanh %34 : vector<8x128xf32>
    %cst_11 = arith.constant 1.000000e+00 : f32
    %36 = vector.broadcast %cst_11 : f32 to vector<8x128xf32>
    %37 = arith.subf %36, %29 : vector<8x128xf32>
    %38 = arith.mulf %37, %35 : vector<8x128xf32>
    %39 = arith.mulf %29, %7 : vector<8x128xf32>
    %40 = arith.addf %38, %39 : vector<8x128xf32>
    %41 = arith.truncf %40 : vector<8x128xf32> to vector<8x128xbf16>
    %42 = arith.index_cast %c0_i32_6 : i32 to index
    %c0_12 = arith.constant 0 : index
    %c0_13 = arith.constant 0 : index
    %43 = vector.load %arg5[%42, %c0_12, %c0_13] : memref<4x8x128xbf16, #tpu.memory_space<vmem>>, vector<1x8x128xbf16>
    %44 = vector.shape_cast %43 : vector<1x8x128xbf16> to vector<8x128xbf16>
    %45 = vector.shape_cast %41 : vector<8x128xbf16> to vector<1x8x128xbf16>
    tpu.vector_store %arg5[%42, %c0_12, %c0_13], %45 {strides = array<i32>} : memref<4x8x128xbf16, #tpu.memory_space<vmem>>, vector<1x8x128xbf16>,
    %c1_i32 = arith.constant 1 : i32
    %46 = arith.index_cast %c1_i32 : i32 to index
    %c0_14 = arith.constant 0 : index
    %c0_15 = arith.constant 0 : index
    %47 = vector.load %arg2[%46, %c0_14, %c0_15] : memref<4x8x384xbf16, #tpu.memory_space<vmem>>, vector<1x8x384xbf16>
    %48 = vector.shape_cast %47 : vector<1x8x384xbf16> to vector<8x384xbf16>
    %49 = arith.extf %48 : vector<8x384xbf16> to vector<8x384xf32>
    %50 = arith.truncf %40 : vector<8x128xf32> to vector<8x128xbf16>
    %cst_16 = arith.constant dense<0.000000e+00> : vector<8x384xf32>
    %51 = tpu.matmul %50, %3, %cst_16 {dimension_numbers = #tpu.dot_dimension_numbers<[1], [0], [0], [1], [0, 0, 1, 1], [], []>} : vector<8x128xbf16>, vector<128x384xbf16>, vector<8x384xf32> -> vector<8x384xf32>
    %52 = vector.extract_strided_slice %49 {offsets = [0, 0], sizes = [8, 128], strides = [1, 1]} : vector<8x384xf32> to vector<8x128xf32>
    %53 = vector.extract_strided_slice %51 {offsets = [0, 0], sizes = [8, 128], strides = [1, 1]} : vector<8x384xf32> to vector<8x128xf32>
    %54 = arith.addf %52, %53 : vector<8x128xf32>
    %55 = arith.negf %54 : vector<8x128xf32>
    %56 = math.exp %55 : vector<8x128xf32>
    %cst_17 = arith.constant 1.000000e+00 : f32
    %57 = vector.broadcast %cst_17 : f32 to vector<8x128xf32>
    %58 = arith.addf %57, %56 : vector<8x128xf32>
    %59 = arith.divf %57, %58 : vector<8x128xf32>
    %60 = vector.extract_strided_slice %49 {offsets = [0, 128], sizes = [8, 128], strides = [1, 1]} : vector<8x384xf32> to vector<8x128xf32>
    %61 = vector.extract_strided_slice %51 {offsets = [0, 128], sizes = [8, 128], strides = [1, 1]} : vector<8x384xf32> to vector<8x128xf32>
    %62 = arith.addf %60, %61 : vector<8x128xf32>
    %63 = arith.negf %62 : vector<8x128xf32>
    %64 = math.exp %63 : vector<8x128xf32>
    %cst_18 = arith.constant 1.000000e+00 : f32
    %65 = vector.broadcast %cst_18 : f32 to vector<8x128xf32>
    %66 = arith.addf %65, %64 : vector<8x128xf32>
    %67 = arith.divf %65, %66 : vector<8x128xf32>
    %68 = vector.extract_strided_slice %49 {offsets = [0, 256], sizes = [8, 128], strides = [1, 1]} : vector<8x384xf32> to vector<8x128xf32>
    %69 = vector.extract_strided_slice %51 {offsets = [0, 256], sizes = [8, 128], strides = [1, 1]} : vector<8x384xf32> to vector<8x128xf32>
    %70 = arith.addf %69, %6 : vector<8x128xf32>
    %71 = arith.mulf %59, %70 : vector<8x128xf32>
    %72 = arith.addf %68, %71 : vector<8x128xf32>
    %73 = math.tanh %72 : vector<8x128xf32>
    %cst_19 = arith.constant 1.000000e+00 : f32
    %74 = vector.broadcast %cst_19 : f32 to vector<8x128xf32>
    %75 = arith.subf %74, %67 : vector<8x128xf32>
    %76 = arith.mulf %75, %73 : vector<8x128xf32>
    %77 = arith.mulf %67, %40 : vector<8x128xf32>
    %78 = arith.addf %76, %77 : vector<8x128xf32>
    %79 = arith.truncf %78 : vector<8x128xf32> to vector<8x128xbf16>
    %80 = arith.index_cast %c1_i32 : i32 to index
    %c0_20 = arith.constant 0 : index
    %c0_21 = arith.constant 0 : index
    %81 = vector.load %arg5[%80, %c0_20, %c0_21] : memref<4x8x128xbf16, #tpu.memory_space<vmem>>, vector<1x8x128xbf16>
    %82 = vector.shape_cast %81 : vector<1x8x128xbf16> to vector<8x128xbf16>
    %83 = vector.shape_cast %79 : vector<8x128xbf16> to vector<1x8x128xbf16>
    tpu.vector_store %arg5[%80, %c0_20, %c0_21], %83 {strides = array<i32>} : memref<4x8x128xbf16, #tpu.memory_space<vmem>>, vector<1x8x128xbf16>,
    %c2_i32 = arith.constant 2 : i32
    %84 = arith.index_cast %c2_i32 : i32 to index
    %c0_22 = arith.constant 0 : index
    %c0_23 = arith.constant 0 : index
    %85 = vector.load %arg2[%84, %c0_22, %c0_23] : memref<4x8x384xbf16, #tpu.memory_space<vmem>>, vector<1x8x384xbf16>
    %86 = vector.shape_cast %85 : vector<1x8x384xbf16> to vector<8x384xbf16>
    %87 = arith.extf %86 : vector<8x384xbf16> to vector<8x384xf32>
    %88 = arith.truncf %78 : vector<8x128xf32> to vector<8x128xbf16>
    %cst_24 = arith.constant dense<0.000000e+00> : vector<8x384xf32>
    %89 = tpu.matmul %88, %3, %cst_24 {dimension_numbers = #tpu.dot_dimension_numbers<[1], [0], [0], [1], [0, 0, 1, 1], [], []>} : vector<8x128xbf16>, vector<128x384xbf16>, vector<8x384xf32> -> vector<8x384xf32>
    %90 = vector.extract_strided_slice %87 {offsets = [0, 0], sizes = [8, 128], strides = [1, 1]} : vector<8x384xf32> to vector<8x128xf32>
    %91 = vector.extract_strided_slice %89 {offsets = [0, 0], sizes = [8, 128], strides = [1, 1]} : vector<8x384xf32> to vector<8x128xf32>
    %92 = arith.addf %90, %91 : vector<8x128xf32>
    %93 = arith.negf %92 : vector<8x128xf32>
    %94 = math.exp %93 : vector<8x128xf32>
    %cst_25 = arith.constant 1.000000e+00 : f32
    %95 = vector.broadcast %cst_25 : f32 to vector<8x128xf32>
    %96 = arith.addf %95, %94 : vector<8x128xf32>
    %97 = arith.divf %95, %96 : vector<8x128xf32>
    %98 = vector.extract_strided_slice %87 {offsets = [0, 128], sizes = [8, 128], strides = [1, 1]} : vector<8x384xf32> to vector<8x128xf32>
    %99 = vector.extract_strided_slice %89 {offsets = [0, 128], sizes = [8, 128], strides = [1, 1]} : vector<8x384xf32> to vector<8x128xf32>
    %100 = arith.addf %98, %99 : vector<8x128xf32>
    %101 = arith.negf %100 : vector<8x128xf32>
    %102 = math.exp %101 : vector<8x128xf32>
    %cst_26 = arith.constant 1.000000e+00 : f32
    %103 = vector.broadcast %cst_26 : f32 to vector<8x128xf32>
    %104 = arith.addf %103, %102 : vector<8x128xf32>
    %105 = arith.divf %103, %104 : vector<8x128xf32>
    %106 = vector.extract_strided_slice %87 {offsets = [0, 256], sizes = [8, 128], strides = [1, 1]} : vector<8x384xf32> to vector<8x128xf32>
    %107 = vector.extract_strided_slice %89 {offsets = [0, 256], sizes = [8, 128], strides = [1, 1]} : vector<8x384xf32> to vector<8x128xf32>
    %108 = arith.addf %107, %6 : vector<8x128xf32>
    %109 = arith.mulf %97, %108 : vector<8x128xf32>
    %110 = arith.addf %106, %109 : vector<8x128xf32>
    %111 = math.tanh %110 : vector<8x128xf32>
    %cst_27 = arith.constant 1.000000e+00 : f32
    %112 = vector.broadcast %cst_27 : f32 to vector<8x128xf32>
    %113 = arith.subf %112, %105 : vector<8x128xf32>
    %114 = arith.mulf %113, %111 : vector<8x128xf32>
    %115 = arith.mulf %105, %78 : vector<8x128xf32>
    %116 = arith.addf %114, %115 : vector<8x128xf32>
    %117 = arith.truncf %116 : vector<8x128xf32> to vector<8x128xbf16>
    %118 = arith.index_cast %c2_i32 : i32 to index
    %c0_28 = arith.constant 0 : index
    %c0_29 = arith.constant 0 : index
    %119 = vector.load %arg5[%118, %c0_28, %c0_29] : memref<4x8x128xbf16, #tpu.memory_space<vmem>>, vector<1x8x128xbf16>
    %120 = vector.shape_cast %119 : vector<1x8x128xbf16> to vector<8x128xbf16>
    %121 = vector.shape_cast %117 : vector<8x128xbf16> to vector<1x8x128xbf16>
    tpu.vector_store %arg5[%118, %c0_28, %c0_29], %121 {strides = array<i32>} : memref<4x8x128xbf16, #tpu.memory_space<vmem>>, vector<1x8x128xbf16>,
    %c3_i32 = arith.constant 3 : i32
    %122 = arith.index_cast %c3_i32 : i32 to index
    %c0_30 = arith.constant 0 : index
    %c0_31 = arith.constant 0 : index
    %123 = vector.load %arg2[%122, %c0_30, %c0_31] : memref<4x8x384xbf16, #tpu.memory_space<vmem>>, vector<1x8x384xbf16>
    %124 = vector.shape_cast %123 : vector<1x8x384xbf16> to vector<8x384xbf16>
    %125 = arith.extf %124 : vector<8x384xbf16> to vector<8x384xf32>
    %126 = arith.truncf %116 : vector<8x128xf32> to vector<8x128xbf16>
    %cst_32 = arith.constant dense<0.000000e+00> : vector<8x384xf32>
    %127 = tpu.matmul %126, %3, %cst_32 {dimension_numbers = #tpu.dot_dimension_numbers<[1], [0], [0], [1], [0, 0, 1, 1], [], []>} : vector<8x128xbf16>, vector<128x384xbf16>, vector<8x384xf32> -> vector<8x384xf32>
    %128 = vector.extract_strided_slice %125 {offsets = [0, 0], sizes = [8, 128], strides = [1, 1]} : vector<8x384xf32> to vector<8x128xf32>
    %129 = vector.extract_strided_slice %127 {offsets = [0, 0], sizes = [8, 128], strides = [1, 1]} : vector<8x384xf32> to vector<8x128xf32>
    %130 = arith.addf %128, %129 : vector<8x128xf32>
    %131 = arith.negf %130 : vector<8x128xf32>
    %132 = math.exp %131 : vector<8x128xf32>
    %cst_33 = arith.constant 1.000000e+00 : f32
    %133 = vector.broadcast %cst_33 : f32 to vector<8x128xf32>
    %134 = arith.addf %133, %132 : vector<8x128xf32>
    %135 = arith.divf %133, %134 : vector<8x128xf32>
    %136 = vector.extract_strided_slice %125 {offsets = [0, 128], sizes = [8, 128], strides = [1, 1]} : vector<8x384xf32> to vector<8x128xf32>
    %137 = vector.extract_strided_slice %127 {offsets = [0, 128], sizes = [8, 128], strides = [1, 1]} : vector<8x384xf32> to vector<8x128xf32>
    %138 = arith.addf %136, %137 : vector<8x128xf32>
    %139 = arith.negf %138 : vector<8x128xf32>
    %140 = math.exp %139 : vector<8x128xf32>
    %cst_34 = arith.constant 1.000000e+00 : f32
    %141 = vector.broadcast %cst_34 : f32 to vector<8x128xf32>
    %142 = arith.addf %141, %140 : vector<8x128xf32>
    %143 = arith.divf %141, %142 : vector<8x128xf32>
    %144 = vector.extract_strided_slice %125 {offsets = [0, 256], sizes = [8, 128], strides = [1, 1]} : vector<8x384xf32> to vector<8x128xf32>
    %145 = vector.extract_strided_slice %127 {offsets = [0, 256], sizes = [8, 128], strides = [1, 1]} : vector<8x384xf32> to vector<8x128xf32>
    %146 = arith.addf %145, %6 : vector<8x128xf32>
    %147 = arith.mulf %135, %146 : vector<8x128xf32>
    %148 = arith.addf %144, %147 : vector<8x128xf32>
    %149 = math.tanh %148 : vector<8x128xf32>
    %cst_35 = arith.constant 1.000000e+00 : f32
    %150 = vector.broadcast %cst_35 : f32 to vector<8x128xf32>
    %151 = arith.subf %150, %143 : vector<8x128xf32>
    %152 = arith.mulf %151, %149 : vector<8x128xf32>
    %153 = arith.mulf %143, %116 : vector<8x128xf32>
    %154 = arith.addf %152, %153 : vector<8x128xf32>
    %155 = arith.truncf %154 : vector<8x128xf32> to vector<8x128xbf16>
    %156 = arith.index_cast %c3_i32 : i32 to index
    %c0_36 = arith.constant 0 : index
    %c0_37 = arith.constant 0 : index
    %157 = vector.load %arg5[%156, %c0_36, %c0_37] : memref<4x8x128xbf16, #tpu.memory_space<vmem>>, vector<1x8x128xbf16>
    %158 = vector.shape_cast %157 : vector<1x8x128xbf16> to vector<8x128xbf16>
    %159 = vector.shape_cast %155 : vector<8x128xbf16> to vector<1x8x128xbf16>
    tpu.vector_store %arg5[%156, %c0_36, %c0_37], %159 {strides = array<i32>} : memref<4x8x128xbf16, #tpu.memory_space<vmem>>, vector<1x8x128xbf16>,
    %c4_i32 = arith.constant 4 : i32
    %c0_38 = arith.constant 0 : index
    %c0_39 = arith.constant 0 : index
    %160 = vector.load %arg6[%c0_38, %c0_39] : memref<8x128xf32, #tpu.memory_space<vmem>>, vector<8x128xf32>
    tpu.vector_store %arg6[%c0_38, %c0_39], %154 {strides = array<i32>} : memref<8x128xf32, #tpu.memory_space<vmem>>, vector<8x128xf32>,
    return
  }
  func.func @transform_0(%arg0: i32, %arg1: i32) -> (i32, i32, i32) {
    %c0_i32 = arith.constant 0 : i32
    %c0_i32_0 = arith.constant 0 : i32
    return %arg1, %arg0, %c0_i32 : i32, i32, i32
  }
  func.func @transform_1(%arg0: i32, %arg1: i32) -> (i32, i32) {
    %c0_i32 = arith.constant 0 : i32
    %c0_i32_0 = arith.constant 0 : i32
    %c0_i32_1 = arith.constant 0 : i32
    return %c0_i32, %c0_i32_0 : i32, i32
  }
  func.func @transform_2(%arg0: i32, %arg1: i32) -> (i32, i32) {
    %c0_i32 = arith.constant 0 : i32
    %c0_i32_0 = arith.constant 0 : i32
    %c0_i32_1 = arith.constant 0 : i32
    return %c0_i32, %c0_i32_0 : i32, i32
  }
  func.func @transform_3(%arg0: i32, %arg1: i32) -> (i32, i32, i32) {
    %c0_i32 = arith.constant 0 : i32
    %c0_i32_0 = arith.constant 0 : i32
    return %arg1, %arg0, %c0_i32 : i32, i32, i32
  }
}

module attributes {stable_mosaic.version = 11 : i64} {
  func.func @_gru_chunk_kernel(%arg0: i32, %arg1: i32, %arg2: memref<4x8x384xbf16, #tpu.memory_space<vmem>>, %arg3: memref<128x384xbf16, #tpu.memory_space<vmem>>, %arg4: memref<1x128xf32, #tpu.memory_space<vmem>>, %arg5: memref<4x8x128xbf16, #tpu.memory_space<vmem>>, %arg6: memref<8x128xf32, #tpu.memory_space<vmem>>) attributes {dimension_semantics = [#tpu.dimension_semantics<parallel>, #tpu.dimension_semantics<arbitrary>], iteration_bounds = array<i64: 1, 2>, scalar_prefetch = 0 : i64, scratch_operands = 1 : i64, tpu.core_type = #tpu.core_type<tc>, window_params = [{transform_indices = @transform_0, window_bounds = array<i64: 4, 8, 384>}, {pipeline_mode = #tpu.pipeline_mode<synchronous>, transform_indices = @transform_1, window_bounds = array<i64: 128, 384>}, {pipeline_mode = #tpu.pipeline_mode<synchronous>, transform_indices = @transform_2, window_bounds = array<i64: 1, 128>}, {transform_indices = @transform_3, window_bounds = array<i64: 4, 8, 128>}]} {
    %c0_i32 = arith.constant 0 : i32
    %0 = arith.cmpi eq, %arg1, %c0_i32 : i32
    %1 = arith.extui %0 : i1 to i32
    %c0_i32_0 = arith.constant 0 : i32
    %2 = arith.cmpi ne, %1, %c0_i32_0 : i32
    scf.if %2 {
      %cst_40 = arith.constant 0.000000e+00 : f32
      %161 = vector.broadcast %cst_40 : f32 to vector<8x128xf32>
      %c0_41 = arith.constant 0 : index
      %c0_42 = arith.constant 0 : index
      %162 = vector.load %arg6[%c0_41, %c0_42] : memref<8x128xf32, #tpu.memory_space<vmem>>, vector<8x128xf32>
      tpu.vector_store %arg6[%c0_41, %c0_42], %161 {strides = array<i32>} : memref<8x128xf32, #tpu.memory_space<vmem>>, vector<8x128xf32>,
    } else {
    }
    %c0 = arith.constant 0 : index
    %c0_1 = arith.constant 0 : index
    %3 = vector.load %arg3[%c0, %c0_1] : memref<128x384xbf16, #tpu.memory_space<vmem>>, vector<128x384xbf16>
    %c0_2 = arith.constant 0 : index
    %c0_3 = arith.constant 0 : index
    %4 = vector.load %arg4[%c0_2, %c0_3] : memref<1x128xf32, #tpu.memory_space<vmem>>, vector<1x128xf32>
    %5 = vector.shape_cast %4 : vector<1x128xf32> to vector<1x128xf32>
    %6 = vector.broadcast %5 : vector<1x128xf32> to vector<8x128xf32>
    %c0_4 = arith.constant 0 : index
    %c0_5 = arith.constant 0 : index
    %7 = vector.load %arg6[%c0_4, %c0_5] : memref<8x128xf32, #tpu.memory_space<vmem>>, vector<8x128xf32>
    %c0_i32_6 = arith.constant 0 : i32
    %8 = arith.index_cast %c0_i32_6 : i32 to index
    %c0_7 = arith.constant 0 : index
    %c0_8 = arith.constant 0 : index
    %9 = vector.load %arg2[%8, %c0_7, %c0_8] : memref<4x8x384xbf16, #tpu.memory_space<vmem>>, vector<1x8x384xbf16>
    %10 = vector.shape_cast %9 : vector<1x8x384xbf16> to vector<8x384xbf16>
    %11 = arith.extf %10 : vector<8x384xbf16> to vector<8x384xf32>
    %12 = arith.truncf %7 : vector<8x128xf32> to vector<8x128xbf16>
    %cst = arith.constant dense<0.000000e+00> : vector<8x384xf32>
    %13 = tpu.matmul %12, %3, %cst {dimension_numbers = #tpu.dot_dimension_numbers<[1], [0], [0], [1], [0, 0, 1, 1], [], []>} : vector<8x128xbf16>, vector<128x384xbf16>, vector<8x384xf32> -> vector<8x384xf32>
    %14 = vector.extract_strided_slice %11 {offsets = [0, 0], sizes = [8, 128], strides = [1, 1]} : vector<8x384xf32> to vector<8x128xf32>
    %15 = vector.extract_strided_slice %13 {offsets = [0, 0], sizes = [8, 128], strides = [1, 1]} : vector<8x384xf32> to vector<8x128xf32>
    %16 = arith.addf %14, %15 : vector<8x128xf32>
    %17 = arith.negf %16 : vector<8x128xf32>
    %18 = math.exp %17 : vector<8x128xf32>
    %cst_9 = arith.constant 1.000000e+00 : f32
    %19 = vector.broadcast %cst_9 : f32 to vector<8x128xf32>
    %20 = arith.addf %19, %18 : vector<8x128xf32>
    %21 = arith.divf %19, %20 : vector<8x128xf32>
    %22 = vector.extract_strided_slice %11 {offsets = [0, 128], sizes = [8, 128], strides = [1, 1]} : vector<8x384xf32> to vector<8x128xf32>
    %23 = vector.extract_strided_slice %13 {offsets = [0, 128], sizes = [8, 128], strides = [1, 1]} : vector<8x384xf32> to vector<8x128xf32>
    %24 = arith.addf %22, %23 : vector<8x128xf32>
    %25 = arith.negf %24 : vector<8x128xf32>
    %26 = math.exp %25 : vector<8x128xf32>
    %cst_10 = arith.constant 1.000000e+00 : f32
    %27 = vector.broadcast %cst_10 : f32 to vector<8x128xf32>
    %28 = arith.addf %27, %26 : vector<8x128xf32>
    %29 = arith.divf %27, %28 : vector<8x128xf32>
    %30 = vector.extract_strided_slice %11 {offsets = [0, 256], sizes = [8, 128], strides = [1, 1]} : vector<8x384xf32> to vector<8x128xf32>
    %31 = vector.extract_strided_slice %13 {offsets = [0, 256], sizes = [8, 128], strides = [1, 1]} : vector<8x384xf32> to vector<8x128xf32>
    %32 = arith.addf %31, %6 : vector<8x128xf32>
    %33 = arith.mulf %21, %32 : vector<8x128xf32>
    %34 = arith.addf %30, %33 : vector<8x128xf32>
    %35 = math.tanh %34 : vector<8x128xf32>
    %cst_11 = arith.constant 1.000000e+00 : f32
    %36 = vector.broadcast %cst_11 : f32 to vector<8x128xf32>
    %37 = arith.subf %36, %29 : vector<8x128xf32>
    %38 = arith.mulf %37, %35 : vector<8x128xf32>
    %39 = arith.mulf %29, %7 : vector<8x128xf32>
    %40 = arith.addf %38, %39 : vector<8x128xf32>
    %41 = arith.truncf %40 : vector<8x128xf32> to vector<8x128xbf16>
    %42 = arith.index_cast %c0_i32_6 : i32 to index
    %c0_12 = arith.constant 0 : index
    %c0_13 = arith.constant 0 : index
    %43 = vector.load %arg5[%42, %c0_12, %c0_13] : memref<4x8x128xbf16, #tpu.memory_space<vmem>>, vector<1x8x128xbf16>
    %44 = vector.shape_cast %43 : vector<1x8x128xbf16> to vector<8x128xbf16>
    %45 = vector.shape_cast %41 : vector<8x128xbf16> to vector<1x8x128xbf16>
    tpu.vector_store %arg5[%42, %c0_12, %c0_13], %45 {strides = array<i32>} : memref<4x8x128xbf16, #tpu.memory_space<vmem>>, vector<1x8x128xbf16>,
    %c1_i32 = arith.constant 1 : i32
    %46 = arith.index_cast %c1_i32 : i32 to index
    %c0_14 = arith.constant 0 : index
    %c0_15 = arith.constant 0 : index
    %47 = vector.load %arg2[%46, %c0_14, %c0_15] : memref<4x8x384xbf16, #tpu.memory_space<vmem>>, vector<1x8x384xbf16>
    %48 = vector.shape_cast %47 : vector<1x8x384xbf16> to vector<8x384xbf16>
    %49 = arith.extf %48 : vector<8x384xbf16> to vector<8x384xf32>
    %50 = arith.truncf %40 : vector<8x128xf32> to vector<8x128xbf16>
    %cst_16 = arith.constant dense<0.000000e+00> : vector<8x384xf32>
    %51 = tpu.matmul %50, %3, %cst_16 {dimension_numbers = #tpu.dot_dimension_numbers<[1], [0], [0], [1], [0, 0, 1, 1], [], []>} : vector<8x128xbf16>, vector<128x384xbf16>, vector<8x384xf32> -> vector<8x384xf32>
    %52 = vector.extract_strided_slice %49 {offsets = [0, 0], sizes = [8, 128], strides = [1, 1]} : vector<8x384xf32> to vector<8x128xf32>
    %53 = vector.extract_strided_slice %51 {offsets = [0, 0], sizes = [8, 128], strides = [1, 1]} : vector<8x384xf32> to vector<8x128xf32>
    %54 = arith.addf %52, %53 : vector<8x128xf32>
    %55 = arith.negf %54 : vector<8x128xf32>
    %56 = math.exp %55 : vector<8x128xf32>
    %cst_17 = arith.constant 1.000000e+00 : f32
    %57 = vector.broadcast %cst_17 : f32 to vector<8x128xf32>
    %58 = arith.addf %57, %56 : vector<8x128xf32>
    %59 = arith.divf %57, %58 : vector<8x128xf32>
    %60 = vector.extract_strided_slice %49 {offsets = [0, 128], sizes = [8, 128], strides = [1, 1]} : vector<8x384xf32> to vector<8x128xf32>
    %61 = vector.extract_strided_slice %51 {offsets = [0, 128], sizes = [8, 128], strides = [1, 1]} : vector<8x384xf32> to vector<8x128xf32>
    %62 = arith.addf %60, %61 : vector<8x128xf32>
    %63 = arith.negf %62 : vector<8x128xf32>
    %64 = math.exp %63 : vector<8x128xf32>
    %cst_18 = arith.constant 1.000000e+00 : f32
    %65 = vector.broadcast %cst_18 : f32 to vector<8x128xf32>
    %66 = arith.addf %65, %64 : vector<8x128xf32>
    %67 = arith.divf %65, %66 : vector<8x128xf32>
    %68 = vector.extract_strided_slice %49 {offsets = [0, 256], sizes = [8, 128], strides = [1, 1]} : vector<8x384xf32> to vector<8x128xf32>
    %69 = vector.extract_strided_slice %51 {offsets = [0, 256], sizes = [8, 128], strides = [1, 1]} : vector<8x384xf32> to vector<8x128xf32>
    %70 = arith.addf %69, %6 : vector<8x128xf32>
    %71 = arith.mulf %59, %70 : vector<8x128xf32>
    %72 = arith.addf %68, %71 : vector<8x128xf32>
    %73 = math.tanh %72 : vector<8x128xf32>
    %cst_19 = arith.constant 1.000000e+00 : f32
    %74 = vector.broadcast %cst_19 : f32 to vector<8x128xf32>
    %75 = arith.subf %74, %67 : vector<8x128xf32>
    %76 = arith.mulf %75, %73 : vector<8x128xf32>
    %77 = arith.mulf %67, %40 : vector<8x128xf32>
    %78 = arith.addf %76, %77 : vector<8x128xf32>
    %79 = arith.truncf %78 : vector<8x128xf32> to vector<8x128xbf16>
    %80 = arith.index_cast %c1_i32 : i32 to index
    %c0_20 = arith.constant 0 : index
    %c0_21 = arith.constant 0 : index
    %81 = vector.load %arg5[%80, %c0_20, %c0_21] : memref<4x8x128xbf16, #tpu.memory_space<vmem>>, vector<1x8x128xbf16>
    %82 = vector.shape_cast %81 : vector<1x8x128xbf16> to vector<8x128xbf16>
    %83 = vector.shape_cast %79 : vector<8x128xbf16> to vector<1x8x128xbf16>
    tpu.vector_store %arg5[%80, %c0_20, %c0_21], %83 {strides = array<i32>} : memref<4x8x128xbf16, #tpu.memory_space<vmem>>, vector<1x8x128xbf16>,
    %c2_i32 = arith.constant 2 : i32
    %84 = arith.index_cast %c2_i32 : i32 to index
    %c0_22 = arith.constant 0 : index
    %c0_23 = arith.constant 0 : index
    %85 = vector.load %arg2[%84, %c0_22, %c0_23] : memref<4x8x384xbf16, #tpu.memory_space<vmem>>, vector<1x8x384xbf16>
    %86 = vector.shape_cast %85 : vector<1x8x384xbf16> to vector<8x384xbf16>
    %87 = arith.extf %86 : vector<8x384xbf16> to vector<8x384xf32>
    %88 = arith.truncf %78 : vector<8x128xf32> to vector<8x128xbf16>
    %cst_24 = arith.constant dense<0.000000e+00> : vector<8x384xf32>
    %89 = tpu.matmul %88, %3, %cst_24 {dimension_numbers = #tpu.dot_dimension_numbers<[1], [0], [0], [1], [0, 0, 1, 1], [], []>} : vector<8x128xbf16>, vector<128x384xbf16>, vector<8x384xf32> -> vector<8x384xf32>
    %90 = vector.extract_strided_slice %87 {offsets = [0, 0], sizes = [8, 128], strides = [1, 1]} : vector<8x384xf32> to vector<8x128xf32>
    %91 = vector.extract_strided_slice %89 {offsets = [0, 0], sizes = [8, 128], strides = [1, 1]} : vector<8x384xf32> to vector<8x128xf32>
    %92 = arith.addf %90, %91 : vector<8x128xf32>
    %93 = arith.negf %92 : vector<8x128xf32>
    %94 = math.exp %93 : vector<8x128xf32>
    %cst_25 = arith.constant 1.000000e+00 : f32
    %95 = vector.broadcast %cst_25 : f32 to vector<8x128xf32>
    %96 = arith.addf %95, %94 : vector<8x128xf32>
    %97 = arith.divf %95, %96 : vector<8x128xf32>
    %98 = vector.extract_strided_slice %87 {offsets = [0, 128], sizes = [8, 128], strides = [1, 1]} : vector<8x384xf32> to vector<8x128xf32>
    %99 = vector.extract_strided_slice %89 {offsets = [0, 128], sizes = [8, 128], strides = [1, 1]} : vector<8x384xf32> to vector<8x128xf32>
    %100 = arith.addf %98, %99 : vector<8x128xf32>
    %101 = arith.negf %100 : vector<8x128xf32>
    %102 = math.exp %101 : vector<8x128xf32>
    %cst_26 = arith.constant 1.000000e+00 : f32
    %103 = vector.broadcast %cst_26 : f32 to vector<8x128xf32>
    %104 = arith.addf %103, %102 : vector<8x128xf32>
    %105 = arith.divf %103, %104 : vector<8x128xf32>
    %106 = vector.extract_strided_slice %87 {offsets = [0, 256], sizes = [8, 128], strides = [1, 1]} : vector<8x384xf32> to vector<8x128xf32>
    %107 = vector.extract_strided_slice %89 {offsets = [0, 256], sizes = [8, 128], strides = [1, 1]} : vector<8x384xf32> to vector<8x128xf32>
    %108 = arith.addf %107, %6 : vector<8x128xf32>
    %109 = arith.mulf %97, %108 : vector<8x128xf32>
    %110 = arith.addf %106, %109 : vector<8x128xf32>
    %111 = math.tanh %110 : vector<8x128xf32>
    %cst_27 = arith.constant 1.000000e+00 : f32
    %112 = vector.broadcast %cst_27 : f32 to vector<8x128xf32>
    %113 = arith.subf %112, %105 : vector<8x128xf32>
    %114 = arith.mulf %113, %111 : vector<8x128xf32>
    %115 = arith.mulf %105, %78 : vector<8x128xf32>
    %116 = arith.addf %114, %115 : vector<8x128xf32>
    %117 = arith.truncf %116 : vector<8x128xf32> to vector<8x128xbf16>
    %118 = arith.index_cast %c2_i32 : i32 to index
    %c0_28 = arith.constant 0 : index
    %c0_29 = arith.constant 0 : index
    %119 = vector.load %arg5[%118, %c0_28, %c0_29] : memref<4x8x128xbf16, #tpu.memory_space<vmem>>, vector<1x8x128xbf16>
    %120 = vector.shape_cast %119 : vector<1x8x128xbf16> to vector<8x128xbf16>
    %121 = vector.shape_cast %117 : vector<8x128xbf16> to vector<1x8x128xbf16>
    tpu.vector_store %arg5[%118, %c0_28, %c0_29], %121 {strides = array<i32>} : memref<4x8x128xbf16, #tpu.memory_space<vmem>>, vector<1x8x128xbf16>,
    %c3_i32 = arith.constant 3 : i32
    %122 = arith.index_cast %c3_i32 : i32 to index
    %c0_30 = arith.constant 0 : index
    %c0_31 = arith.constant 0 : index
    %123 = vector.load %arg2[%122, %c0_30, %c0_31] : memref<4x8x384xbf16, #tpu.memory_space<vmem>>, vector<1x8x384xbf16>
    %124 = vector.shape_cast %123 : vector<1x8x384xbf16> to vector<8x384xbf16>
    %125 = arith.extf %124 : vector<8x384xbf16> to vector<8x384xf32>
    %126 = arith.truncf %116 : vector<8x128xf32> to vector<8x128xbf16>
    %cst_32 = arith.constant dense<0.000000e+00> : vector<8x384xf32>
    %127 = tpu.matmul %126, %3, %cst_32 {dimension_numbers = #tpu.dot_dimension_numbers<[1], [0], [0], [1], [0, 0, 1, 1], [], []>} : vector<8x128xbf16>, vector<128x384xbf16>, vector<8x384xf32> -> vector<8x384xf32>
    %128 = vector.extract_strided_slice %125 {offsets = [0, 0], sizes = [8, 128], strides = [1, 1]} : vector<8x384xf32> to vector<8x128xf32>
    %129 = vector.extract_strided_slice %127 {offsets = [0, 0], sizes = [8, 128], strides = [1, 1]} : vector<8x384xf32> to vector<8x128xf32>
    %130 = arith.addf %128, %129 : vector<8x128xf32>
    %131 = arith.negf %130 : vector<8x128xf32>
    %132 = math.exp %131 : vector<8x128xf32>
    %cst_33 = arith.constant 1.000000e+00 : f32
    %133 = vector.broadcast %cst_33 : f32 to vector<8x128xf32>
    %134 = arith.addf %133, %132 : vector<8x128xf32>
    %135 = arith.divf %133, %134 : vector<8x128xf32>
    %136 = vector.extract_strided_slice %125 {offsets = [0, 128], sizes = [8, 128], strides = [1, 1]} : vector<8x384xf32> to vector<8x128xf32>
    %137 = vector.extract_strided_slice %127 {offsets = [0, 128], sizes = [8, 128], strides = [1, 1]} : vector<8x384xf32> to vector<8x128xf32>
    %138 = arith.addf %136, %137 : vector<8x128xf32>
    %139 = arith.negf %138 : vector<8x128xf32>
    %140 = math.exp %139 : vector<8x128xf32>
    %cst_34 = arith.constant 1.000000e+00 : f32
    %141 = vector.broadcast %cst_34 : f32 to vector<8x128xf32>
    %142 = arith.addf %141, %140 : vector<8x128xf32>
    %143 = arith.divf %141, %142 : vector<8x128xf32>
    %144 = vector.extract_strided_slice %125 {offsets = [0, 256], sizes = [8, 128], strides = [1, 1]} : vector<8x384xf32> to vector<8x128xf32>
    %145 = vector.extract_strided_slice %127 {offsets = [0, 256], sizes = [8, 128], strides = [1, 1]} : vector<8x384xf32> to vector<8x128xf32>
    %146 = arith.addf %145, %6 : vector<8x128xf32>
    %147 = arith.mulf %135, %146 : vector<8x128xf32>
    %148 = arith.addf %144, %147 : vector<8x128xf32>
    %149 = math.tanh %148 : vector<8x128xf32>
    %cst_35 = arith.constant 1.000000e+00 : f32
    %150 = vector.broadcast %cst_35 : f32 to vector<8x128xf32>
    %151 = arith.subf %150, %143 : vector<8x128xf32>
    %152 = arith.mulf %151, %149 : vector<8x128xf32>
    %153 = arith.mulf %143, %116 : vector<8x128xf32>
    %154 = arith.addf %152, %153 : vector<8x128xf32>
    %155 = arith.truncf %154 : vector<8x128xf32> to vector<8x128xbf16>
    %156 = arith.index_cast %c3_i32 : i32 to index
    %c0_36 = arith.constant 0 : index
    %c0_37 = arith.constant 0 : index
    %157 = vector.load %arg5[%156, %c0_36, %c0_37] : memref<4x8x128xbf16, #tpu.memory_space<vmem>>, vector<1x8x128xbf16>
    %158 = vector.shape_cast %157 : vector<1x8x128xbf16> to vector<8x128xbf16>
    %159 = vector.shape_cast %155 : vector<8x128xbf16> to vector<1x8x128xbf16>
    tpu.vector_store %arg5[%156, %c0_36, %c0_37], %159 {strides = array<i32>} : memref<4x8x128xbf16, #tpu.memory_space<vmem>>, vector<1x8x128xbf16>,
    %c4_i32 = arith.constant 4 : i32
    %c0_38 = arith.constant 0 : index
    %c0_39 = arith.constant 0 : index
    %160 = vector.load %arg6[%c0_38, %c0_39] : memref<8x128xf32, #tpu.memory_space<vmem>>, vector<8x128xf32>
    tpu.vector_store %arg6[%c0_38, %c0_39], %154 {strides = array<i32>} : memref<8x128xf32, #tpu.memory_space<vmem>>, vector<8x128xf32>,
    return
  }
  func.func @transform_0(%arg0: i32, %arg1: i32) -> (i32, i32, i32) {
    %c0_i32 = arith.constant 0 : i32
    %c0_i32_0 = arith.constant 0 : i32
    return %arg1, %arg0, %c0_i32 : i32, i32, i32
  }
  func.func @transform_1(%arg0: i32, %arg1: i32) -> (i32, i32) {
    %c0_i32 = arith.constant 0 : i32
    %c0_i32_0 = arith.constant 0 : i32
    %c0_i32_1 = arith.constant 0 : i32
    return %c0_i32, %c0_i32_0 : i32, i32
  }
  func.func @transform_2(%arg0: i32, %arg1: i32) -> (i32, i32) {
    %c0_i32 = arith.constant 0 : i32
    %c0_i32_0 = arith.constant 0 : i32
    %c0_i32_1 = arith.constant 0 : i32
    return %c0_i32, %c0_i32_0 : i32, i32
  }
  func.func @transform_3(%arg0: i32, %arg1: i32) -> (i32, i32, i32) {
    %c0_i32 = arith.constant 0 : i32
    %c0_i32_0 = arith.constant 0 : i32
    return %arg1, %arg0, %c0_i32 : i32, i32, i32
  }
}

</mosaic_0001>

<llo_original>
// kernel: encoder_rnn_forward.2
$region0: #{encoder_rnn_forward.2}
  #allocation0 [shape = 'u32[]', space=smem, size = 0x4, offset = 0x4, fixed_abs, tag = 'smem constant byte address 0x4 - core index']
  #allocation1 [shape = 'u32[72,128]{1,0:T(1,128)}', space=vmem, size = 0x9000, scoped, tag = 'internal scratch']
  #allocation2 [shape = 'f32[8,128]{1,0:T(8,128)}', space=vmem, size = 0x1000, scoped, tag = 'scratch operand']
  %s0 = inlined_call_operand.vmem [shape: bf16[8,8,384], index: 0, kind: input, shape index: {}]
  %s1 = inlined_call_operand.hbm [shape: bf16[128,384], index: 1, kind: input, shape index: {}]
  %s2 = inlined_call_operand.vmem [shape: f32[1,128], index: 2, kind: input, shape index: {}]
  %s3 = inlined_call_operand.vmem [shape: bf16[8,8,128], index: 3, kind: output, shape index: {}]
  %s4 = sld [smem:[#allocation0]]
  $region53: #{encoder_rnn_forward.2} parent=0
    _
  %s6 = ssub.s32 1, %s4
  %s7 = scalar_select 0, %s6, %s4
  $region1: #{encoder_rnn_forward.2} parent=0
    #allocation3 [shape = 'u8[98304]{0}', space=vmem, size = 0x18000, scoped, tag = 'input window, operand 1, single buffered']
    #allocation4 [shape = 's32[2]{0}', space=sflag, size = 0x8, scoped, tag = 'scoped memory for encoder_rnn_forward.2']
    %8 = vsyncpa [#allocation4], 0
    loop: start=0, step=1, limit=4
    $region2: #{encoder_rnn_forward.2} parent=1 // loop_pre_header
      _
    $region3: #{encoder_rnn_forward.2} parent=1 // loop_header
      %s10 = sphi 0, %s14
      %p11 = scmp.ge.s32.totalorder %s10, 4
      %s17 = sphi 0, %s29
      %s18 = sphi 0, %s25
      %s19 = sphi 0, %s17
      %s20 = sphi 0, %s18
      %s21 = sphi 0, %s19
      %s22 = sphi 0, %s20
      %s34 = sphi 0, %s36
      %s37 = sphi 0, %s34
      %s38 = sphi 0, %s37
      %s54 = sphi 0, %s38
      %s58 = sphi 0, %s58
      %s60 = sphi 0, %s58
      %s61 = sphi 0, %s60
      %s75 = sphi 0, %s61
      %s79 = sphi 0, %s79
      %s81 = sphi 0, %s79
      %s82 = sphi 0, %s81
      %s96 = sphi 0, %s82
      %s104 = sphi 0, %s106
      %s107 = sphi 0, %s104
      %s108 = sphi 0, %s107
      %s124 = sphi 0, %s108
    $region4: #{encoder_rnn_forward.2} parent=1 // loop_header_branch
      %13 = sbr.rel (%p11) target = $region8
    $region5: #{encoder_rnn_forward.2} parent=1 // loop_body
      %s15 = ssub.s32 %s10, 1
      %s16 = ssub.s32 %s10, 2
      %s23 = sadd.s32 1, %s18
      %p24 = scmp.ge.s32.totalorder %s23, 2
      %s25 = scalar_select %p24, 0, %s23
      %s26 = sadd.s32 1, %s17
      %s27 = scalar_select %p24, %s26, %s17
      %p28 = scmp.ge.s32.totalorder %s27, 1
      %s29 = scalar_select %p28, 0, %s27
      %s30 = ssub.s32 %s18, %s25
      %s31 = ssub.s32 %s17, %s29
      %s32 = sor.u32 %s30, %s31
      %p33 = scmp.eq.s32.totalorder %s32, 0
      %s35 = sadd.s32 %s34, 1
      %s36 = scalar_select %p33, %s34, %s35
      %p39 = pneg %p33
      %p40 = scmp.eq.s32.totalorder %s10, 1
      %p41 = por %p39, %p40
      %p42 = scmp.ne.s32.totalorder %s34, %s37
      %p43 = scmp.eq.s32.totalorder %s10, 0
      %p44 = por %p42, %p43
      %p45 = scmp.ne.s32.totalorder %s34, %s37
      %p46 = scmp.eq.s32.totalorder %s15, 1
      %p47 = por %p45, %p46
      %p48 = scmp.ne.s32.totalorder %s37, %s38
      %p49 = scmp.eq.s32.totalorder %s15, 0
      %p50 = por %p48, %p49
      %p51 = scmp.ne.s32.totalorder %s37, %s38
      %p52 = scmp.eq.s32.totalorder %s16, 1
      %p53 = por %p51, %p52
      %p55 = scmp.ne.s32.totalorder %s38, %s54
      %p56 = scmp.eq.s32.totalorder %s16, 0
      %p57 = por %p55, %p56
      %s59 = sadd.s32 %s58, 1
      %p62 = scmp.eq.s32.totalorder %s10, 1
      %p63 = scmp.ne.s32.totalorder %s58, %s60
      %p64 = scmp.eq.s32.totalorder %s10, 0
      %p65 = por %p63, %p64
      %p66 = scmp.ne.s32.totalorder %s58, %s60
      %p67 = scmp.eq.s32.totalorder %s15, 1
      %p68 = por %p66, %p67
      %p69 = scmp.ne.s32.totalorder %s60, %s61
      %p70 = scmp.eq.s32.totalorder %s15, 0
      %p71 = por %p69, %p70
      %p72 = scmp.ne.s32.totalorder %s60, %s61
      %p73 = scmp.eq.s32.totalorder %s16, 1
      %p74 = por %p72, %p73
      %p76 = scmp.ne.s32.totalorder %s61, %s75
      %p77 = scmp.eq.s32.totalorder %s16, 0
      %p78 = por %p76, %p77
      %s80 = sadd.s32 %s79, 1
      %p83 = scmp.eq.s32.totalorder %s10, 1
      %p84 = scmp.ne.s32.totalorder %s79, %s81
      %p85 = scmp.eq.s32.totalorder %s10, 0
      %p86 = por %p84, %p85
      %p87 = scmp.ne.s32.totalorder %s79, %s81
      %p88 = scmp.eq.s32.totalorder %s15, 1
      %p89 = por %p87, %p88
      %p90 = scmp.ne.s32.totalorder %s81, %s82
      %p91 = scmp.eq.s32.totalorder %s15, 0
      %p92 = por %p90, %p91
      %p93 = scmp.ne.s32.totalorder %s81, %s82
      %p94 = scmp.eq.s32.totalorder %s16, 1
      %p95 = por %p93, %p94
      %p97 = scmp.ne.s32.totalorder %s82, %s96
      %p98 = scmp.eq.s32.totalorder %s16, 0
      %p99 = por %p97, %p98
      %s100 = ssub.s32 %s18, %s25
      %s101 = ssub.s32 %s17, %s29
      %s102 = sor.u32 %s100, %s101
      %p103 = scmp.eq.s32.totalorder %s102, 0
      %s105 = sadd.s32 %s104, 1
      %s106 = scalar_select %p103, %s104, %s105
      %p109 = pneg %p103
      %p110 = scmp.eq.s32.totalorder %s10, 1
      %p111 = por %p109, %p110
      %p112 = scmp.ne.s32.totalorder %s104, %s107
      %p113 = scmp.eq.s32.totalorder %s10, 0
      %p114 = por %p112, %p113
      %p115 = scmp.ne.s32.totalorder %s104, %s107
      %p116 = scmp.eq.s32.totalorder %s15, 1
      %p117 = por %p115, %p116
      %p118 = scmp.ne.s32.totalorder %s107, %s108
      %p119 = scmp.eq.s32.totalorder %s15, 0
      %p120 = por %p118, %p119
      %p121 = scmp.ne.s32.totalorder %s107, %s108
      %p122 = scmp.eq.s32.totalorder %s16, 1
      %p123 = por %p121, %p122
      %p125 = scmp.ne.s32.totalorder %s108, %s124
      %p126 = scmp.eq.s32.totalorder %s16, 0
      %p127 = por %p125, %p126
      %p128 = scmp.le.s32.totalorder 1, %s10
      %p129 = scmp.lt.s32.totalorder %s10, 3
      %p130 = pnand %p128, %p129
      %p131 = pneg %p130
      // Predicated region
      $region9: #{encoder_rnn_forward.2} parent=5 // pred_check
        _
      $region10: #{encoder_rnn_forward.2} parent=5 // pred_check_branch
        %133 = sbr.rel (%p130) target = $region12
      $region11: #{encoder_rnn_forward.2} parent=5 // pred_region
        %s134 = ssub.s32 %s10, 1
        // Predicated region
        $region13: #{encoder_rnn_forward.2} parent=11 // pred_check
          %p135 = pneg %p71
        $region14: #{encoder_rnn_forward.2} parent=11 // pred_check_branch
          %137 = sbr.rel (%p135) target = $region16
        $region15: #{encoder_rnn_forward.2} parent=11 // pred_region
          %139 = vsyncadd [#allocation4], 0
          %s140 = sshll.u32 %s1, 4
          %s141 = int_to_ptr.hbm [resolvable:$true] %s140
          %s142 = sshll.u32 [#allocation3], 4
          %s143 = int_to_ptr.vmem [resolvable:$true] %s142
          %148 = dma.hbm_to_vmem [thread:$0]  %s141, 3072, %s143, [#allocation4], 192, 192, 12
        $region16: #{encoder_rnn_forward.2} parent=11 // pred_fallthru
          _
        // Predicated region
        $region17: #{encoder_rnn_forward.2} parent=11 // pred_check
          %p149 = pneg %p92
        $region18: #{encoder_rnn_forward.2} parent=11 // pred_check_branch
          %151 = sbr.rel (%p149) target = $region20
        $region19: #{encoder_rnn_forward.2} parent=11 // pred_region
          _
        $region20: #{encoder_rnn_forward.2} parent=11 // pred_fallthru
          _
      $region12: #{encoder_rnn_forward.2} parent=5 // pred_fallthru
        _
      %p152 = scmp.lt.s32.totalorder %s10, 2
      // Predicated region
      $region21: #{encoder_rnn_forward.2} parent=5 // pred_check
        %p153 = pneg %p152
      $region22: #{encoder_rnn_forward.2} parent=5 // pred_check_branch
        %155 = sbr.rel (%p153) target = $region24
      $region23: #{encoder_rnn_forward.2} parent=5 // pred_region
        // Predicated region
        $region25: #{encoder_rnn_forward.2} parent=23 // pred_check
          %p156 = pneg %p44
        $region26: #{encoder_rnn_forward.2} parent=23 // pred_check_branch
          %158 = sbr.rel (%p156) target = $region28
        $region27: #{encoder_rnn_forward.2} parent=23 // pred_region
          %s159 = smul.u32 4, %s18
          %p160 = scmp.lt.s32.totalorder %s159, 7
          %s161 = scalar_select %p160, %s159, 7
          %p162 = scmp.lt.s32.totalorder %s17, 0
          %s163 = scalar_select %p162, %s17, 0
          %s164 = smul.addr %s163, 3
          %s165 = smul.addr %s161, 3
          %s166 = sadd.s32 %s164, %s165
          %s167 = smul.addr %s166, 4
          %s168 = scalar_lea.vmem %s0, %s167
          %s169 = smul.u32 4, %s18
        $region28: #{encoder_rnn_forward.2} parent=23 // pred_fallthru
          _
      $region24: #{encoder_rnn_forward.2} parent=5 // pred_fallthru
        _
      %p170 = scmp.le.s32.totalorder 1, %s10
      %p171 = scmp.lt.s32.totalorder %s10, 3
      %p172 = pnand %p170, %p171
      %p173 = pneg %p172
      // Predicated region
      $region29: #{encoder_rnn_forward.2} parent=5 // pred_check
        _
      $region30: #{encoder_rnn_forward.2} parent=5 // pred_check_branch
        %175 = sbr.rel (%p172) target = $region32
      $region31: #{encoder_rnn_forward.2} parent=5 // pred_region
        %s176 = ssub.s32 %s10, 1
        // Predicated region
        $region33: #{encoder_rnn_forward.2} parent=31 // pred_check
          %p177 = pneg %p71
        $region34: #{encoder_rnn_forward.2} parent=31 // pred_check_branch
          %179 = sbr.rel (%p177) target = $region36
        $region35: #{encoder_rnn_forward.2} parent=31 // pred_region
          %181 = dma.done [#allocation4], 3072
        $region36: #{encoder_rnn_forward.2} parent=31 // pred_fallthru
          _
        %s182 = smul.u32 4, %s20
        %p183 = scmp.lt.s32.totalorder %s182, 7
        %s184 = scalar_select %p183, %s182, 7
        %p185 = scmp.lt.s32.totalorder %s19, 0
        %s186 = scalar_select %p185, %s19, 0
        %s187 = smul.addr %s186, 3
        %s188 = smul.addr %s184, 3
        %s189 = sadd.s32 %s187, %s188
        %s190 = smul.addr %s189, 4
        %s191 = scalar_lea.vmem %s0, %s190
        %p192 = pneg %p50
        %p193 = pneg %p47
        %p194 = pneg %p71
        %p195 = pneg %p68
        %p196 = pneg %p92
        %p197 = pneg %p89
        %p198 = pneg %p120
        %p199 = pneg %p117
        %s200 = smul.u32 4, %s20
        %p201 = scmp.lt.s32.totalorder %s200, 7
        %s202 = scalar_select %p201, %s200, 7
        %p203 = scmp.lt.s32.totalorder %s19, 0
        %s204 = scalar_select %p203, %s19, 0
        %s205 = sadd.s32 %s204, %s202
        %s206 = smul.addr %s205, 4
        %s207 = scalar_lea.vmem %s3, %s206
        %s208 = smul.u32 4, %s20
        %p209 = scmp.lt.s32.totalorder %s208, 7
        %s210 = scalar_select %p209, %s208, 7
        %p211 = scmp.lt.s32.totalorder %s19, 0
        %s212 = scalar_select %p211, %s19, 0
        %s213 = smul.addr %s212, 3
        %s214 = smul.addr %s210, 3
        %s215 = sadd.s32 %s213, %s214
        %s216 = smul.addr %s215, 4
        %s217 = scalar_lea.vmem %s0, %s216
        %s218 = smul.u32 4, %s20
        %s219 = smul.u32 4, %s20
        %p220 = scmp.lt.s32.totalorder %s219, 7
        %s221 = scalar_select %p220, %s219, 7
        %p222 = scmp.lt.s32.totalorder %s19, 0
        %s223 = scalar_select %p222, %s19, 0
        %s224 = sadd.s32 %s223, %s221
        %s225 = smul.addr %s224, 4
        %s226 = scalar_lea.vmem %s3, %s225
        %s227 = smul.u32 4, %s20
        %p228 = scmp.eq.s32.totalorder %s20, 0
        // Predicated region
        $region37: #{encoder_rnn_forward.2} parent=31 // pred_check
          %p229 = pneg %p228
        $region38: #{encoder_rnn_forward.2} parent=31 // pred_check_branch
          %231 = sbr.rel (%p229) target = $region40
        $region39: #{encoder_rnn_forward.2} parent=31 // pred_region
          %232 = vst [vmem:[#allocation2] sm:$0xff] 0.0
        $region40: #{encoder_rnn_forward.2} parent=31 // pred_fallthru
          _
        %v233 = vld [vmem:[#allocation3] sm:$0xff]
        %v234 = vld [vmem:[#allocation3 + $0x8] sm:$0xf]
        %v235 = vld [vmem:[#allocation3 + $0xc] sm:$0xff]
        %v236 = vld [vmem:[#allocation3 + $0x14] sm:$0xf]
        %v237 = vld [vmem:[#allocation3 + $0x18] sm:$0xff]
        %v238 = vld [vmem:[#allocation3 + $0x20] sm:$0xf]
        %v239 = vld [vmem:[#allocation3 + $0x24] sm:$0xff]
        %v240 = vld [vmem:[#allocation3 + $0x2c] sm:$0xf]
        %v241 = vld [vmem:[#allocation3 + $0x30] sm:$0xff]
        %v242 = vld [vmem:[#allocation3 + $0x38] sm:$0xf]
        %v243 = vld [vmem:[#allocation3 + $0x3c] sm:$0xff]
        %v244 = vld [vmem:[#allocation3 + $0x44] sm:$0xf]
        %v245 = vld [vmem:[#allocation3 + $0x48] sm:$0xff]
        %v246 = vld [vmem:[#allocation3 + $0x50] sm:$0xf]
        %v247 = vld [vmem:[#allocation3 + $0x54] sm:$0xff]
        %v248 = vld [vmem:[#allocation3 + $0x5c] sm:$0xf]
        %v249 = vld [vmem:[#allocation3 + $0x60] sm:$0xff]
        %v250 = vld [vmem:[#allocation3 + $0x68] sm:$0xf]
        %v251 = vld [vmem:[#allocation3 + $0x6c] sm:$0xff]
        %v252 = vld [vmem:[#allocation3 + $0x74] sm:$0xf]
        %v253 = vld [vmem:[#allocation3 + $0x78] sm:$0xff]
        %v254 = vld [vmem:[#allocation3 + $0x80] sm:$0xf]
        %v255 = vld [vmem:[#allocation3 + $0x84] sm:$0xff]
        %v256 = vld [vmem:[#allocation3 + $0x8c] sm:$0xf]
        %v257 = vld [vmem:[#allocation3 + $0x90] sm:$0xff]
        %v258 = vld [vmem:[#allocation3 + $0x98] sm:$0xf]
        %v259 = vld [vmem:[#allocation3 + $0x9c] sm:$0xff]
        %v260 = vld [vmem:[#allocation3 + $0xa4] sm:$0xf]
        %v261 = vld [vmem:[#allocation3 + $0xa8] sm:$0xff]
        %v262 = vld [vmem:[#allocation3 + $0xb0] sm:$0xf]
        %v263 = vld [vmem:[#allocation3 + $0xb4] sm:$0xff]
        %v264 = vld [vmem:[#allocation3 + $0xbc] sm:$0xf]
        %v265 = vld [vmem:[%s2] sm:$0x1]
        %v267 = vperm.slane %v265, 0
        %v269 = vld [vmem:[#allocation2] sm:$0xff]
        %v270 = vld [vmem:[%s217] sm:$0xff]
        %v271 = vld [vmem:[%s217 + $0x8] sm:$0xf]
        %v272 = vunpack.c.l.bf16 %v270
        %v273 = vunpack.c.h.bf16 %v270
        %v274 = vunpack.c.l.bf16 %v271
        %v275 = vpack.c.bf16 %v269, %v269
        %v308 = vunpack.c.l.b16 %v233
        %v309 = vunpack.c.h.b16 %v233
        %v310 = vunpack.c.l.b16 %v234
        %v311 = vunpack.c.l.b16 %v235
        %v312 = vunpack.c.h.b16 %v235
        %v313 = vunpack.c.l.b16 %v236
        %v314 = vunpack.c.l.b16 %v237
        %v315 = vunpack.c.h.b16 %v237
        %v316 = vunpack.c.l.b16 %v238
        %v317 = vunpack.c.l.b16 %v239
        %v318 = vunpack.c.h.b16 %v239
        %v319 = vunpack.c.l.b16 %v240
        %v320 = vunpack.c.l.b16 %v241
        %v321 = vunpack.c.h.b16 %v241
        %v322 = vunpack.c.l.b16 %v242
        %v323 = vunpack.c.l.b16 %v243
        %v324 = vunpack.c.h.b16 %v243
        %v325 = vunpack.c.l.b16 %v244
        %v326 = vunpack.c.l.b16 %v245
        %v327 = vunpack.c.h.b16 %v245
        %v328 = vunpack.c.l.b16 %v246
        %v329 = vunpack.c.l.b16 %v247
        %v330 = vunpack.c.h.b16 %v247
        %v331 = vunpack.c.l.b16 %v248
        %v332 = vunpack.c.l.b16 %v249
        %v333 = vunpack.c.h.b16 %v249
        %v334 = vunpack.c.l.b16 %v250
        %v335 = vunpack.c.l.b16 %v251
        %v336 = vunpack.c.h.b16 %v251
        %v337 = vunpack.c.l.b16 %v252
        %v338 = vunpack.c.l.b16 %v253
        %v339 = vunpack.c.h.b16 %v253
        %v340 = vunpack.c.l.b16 %v254
        %v341 = vunpack.c.l.b16 %v255
        %v342 = vunpack.c.h.b16 %v255
        %v343 = vunpack.c.l.b16 %v256
        %v344 = vunpack.c.l.b16 %v257
        %v345 = vunpack.c.h.b16 %v257
        %v346 = vunpack.c.l.b16 %v258
        %v347 = vunpack.c.l.b16 %v259
        %v348 = vunpack.c.h.b16 %v259
        %v349 = vunpack.c.l.b16 %v260
        %v350 = vunpack.c.l.b16 %v261
        %v351 = vunpack.c.h.b16 %v261
        %v352 = vunpack.c.l.b16 %v262
        %v353 = vunpack.c.l.b16 %v263
        %v354 = vunpack.c.h.b16 %v263
        %v355 = vunpack.c.l.b16 %v264
        %v356 = vpack.c.b16 %v311, %v308
        %v357 = vpack.c.b16 %v312, %v309
        %v358 = vpack.c.b16 %v313, %v310
        %v359 = vpack.c.b16 %v317, %v314
        %v360 = vpack.c.b16 %v318, %v315
        %v361 = vpack.c.b16 %v319, %v316
        %v362 = vpack.c.b16 %v323, %v320
        %v363 = vpack.c.b16 %v324, %v321
        %v364 = vpack.c.b16 %v325, %v322
        %v365 = vpack.c.b16 %v329, %v326
        %v366 = vpack.c.b16 %v330, %v327
        %v367 = vpack.c.b16 %v331, %v328
        %v368 = vpack.c.b16 %v335, %v332
        %v369 = vpack.c.b16 %v336, %v333
        %v370 = vpack.c.b16 %v337, %v334
        %v371 = vpack.c.b16 %v341, %v338
        %v372 = vpack.c.b16 %v342, %v339
        %v373 = vpack.c.b16 %v343, %v340
        %v374 = vpack.c.b16 %v347, %v344
        %v375 = vpack.c.b16 %v348, %v345
        %v376 = vpack.c.b16 %v349, %v346
        %v377 = vpack.c.b16 %v353, %v350
        %v378 = vpack.c.b16 %v354, %v351
        %v379 = vpack.c.b16 %v355, %v352
        %404 = vmatpush.bf16.msra.mxu0 %v377
        %405 = vmatpush.bf16.msra.mxu0 %v374
        %406 = vmatpush.bf16.msra.mxu0 %v371
        %407 = vmatpush.bf16.msra.mxu0 %v368
        %408 = vmatpush.bf16.msra.mxu0 %v365
        %409 = vmatpush.bf16.msra.mxu0 %v362
        %410 = vmatpush.bf16.msra.mxu0 %v359
        %411 = vmatpush.bf16.msra.mxu0 %v356
        %412 = vmatmul.bf16.gmra.mxu0 %v275
        %v413 = vpop.f32.mrf.mxu0
        %v414 = vadd.f32 0.0, %v413
        %v415 = vpop.f32.mrf.mxu0
        %416 = vdwg.mxu0
        %417 = vmatpush.bf16.msra.mxu0 %v378
        %418 = vmatpush.bf16.msra.mxu0 %v375
        %419 = vmatpush.bf16.msra.mxu0 %v372
        %420 = vmatpush.bf16.msra.mxu0 %v369
        %421 = vmatpush.bf16.msra.mxu0 %v366
        %422 = vmatpush.bf16.msra.mxu0 %v363
        %423 = vmatpush.bf16.msra.mxu0 %v360
        %424 = vmatpush.bf16.msra.mxu0 %v357
        %425 = vmatmul.bf16.gmra.mxu0 %v275
        %v426 = vpop.f32.mrf.mxu0
        %v427 = vadd.f32 0.0, %v426
        %v428 = vpop.f32.mrf.mxu0
        %429 = vdwg.mxu0
        %430 = vmatpush.bf16.msra.mxu0 %v379
        %431 = vmatpush.bf16.msra.mxu0 %v376
        %432 = vmatpush.bf16.msra.mxu0 %v373
        %433 = vmatpush.bf16.msra.mxu0 %v370
        %434 = vmatpush.bf16.msra.mxu0 %v367
        %435 = vmatpush.bf16.msra.mxu0 %v364
        %436 = vmatpush.bf16.msra.mxu0 %v361
        %437 = vmatpush.bf16.msra.mxu0 %v358
        %438 = vmatmul.bf16.gmra.mxu0 %v275
        %v439 = vpop.f32.mrf.mxu0
        %v440 = vadd.f32 0.0, %v439
        %v441 = vpop.f32.mrf.mxu0
        %442 = vdwg.mxu0
        %v443 = vadd.f32 %v272, %v414
        %v444 = vxor.u32 %v443, 2147483648
        %v445 = vmul.f32 %v444, 1.442695
        %v446 = vpow.pop %v445
        %v447 = vadd.f32 %v446, 1.0
        %v448 = vrcp.pop %v447
        %v449 = vmul.f32 %v447, %v448
        %v450 = vsub.f32 1.0, %v449
        %v451 = vmul.f32 %v448, %v450
        %v452 = vadd.f32 %v448, %v451
        %vm453 = vweird.f32 %v447
        %vm454 = vweird.f32 %v448
        %vm455 = vmor %vm453, %vm454
        %v456 = vsel %vm455, %v448, %v452
        %v457 = vand.u32 2147483647, %v447
        %vm458 = vcmp.eq.f32.partialorder %v457, 8.507059e+37
        %v459 = vand.u32 %v447, 2147483648
        %v460 = vor.u32 1.1754944e-38, %v459
        %v461 = vsel %vm458, %v460, %v456
        %v462 = vmul.f32 1.0, %v461
        %v463 = vadd.f32 %v273, %v427
        %v464 = vxor.u32 %v463, 2147483648
        %v465 = vmul.f32 %v464, 1.442695
        %v466 = vpow.pop %v465
        %v467 = vadd.f32 %v466, 1.0
        %v468 = vrcp.pop %v467
        %v469 = vmul.f32 %v467, %v468
        %v470 = vsub.f32 1.0, %v469
        %v471 = vmul.f32 %v468, %v470
        %v472 = vadd.f32 %v468, %v471
        %vm473 = vweird.f32 %v467
        %vm474 = vweird.f32 %v468
        %vm475 = vmor %vm473, %vm474
        %v476 = vsel %vm475, %v468, %v472
        %v477 = vand.u32 2147483647, %v467
        %vm478 = vcmp.eq.f32.partialorder %v477, 8.507059e+37
        %v479 = vand.u32 %v467, 2147483648
        %v480 = vor.u32 1.1754944e-38, %v479
        %v481 = vsel %vm478, %v480, %v476
        %v482 = vmul.f32 1.0, %v481
        %v483 = vadd.f32 %v440, %v267
        %v484 = vmul.f32 %v462, %v483
        %v485 = vadd.f32 %v274, %v484
        %v486 = vtanh.pop %v485
        %v487 = vsub.f32 1.0, %v482
        %v488 = vmul.f32 %v487, %v486
        %v489 = vmul.f32 %v482, %v269
        %v490 = vadd.f32 %v488, %v489
        %v491 = vpack.c.bf16 %v490, %v490
        %492 = vst [vmem:[%s226] sm:$0xf] %v491
        %s493 = scalar_lea.vmem %s217, 12
        %v494 = vld [vmem:[%s493] sm:$0xff]
        %v495 = vld [vmem:[%s493 + $0x8] sm:$0xf]
        %v496 = vunpack.c.l.bf16 %v494
        %v497 = vunpack.c.h.bf16 %v494
        %v498 = vunpack.c.l.bf16 %v495
        %499 = vmatpush.bf16.msra.mxu0 %v377
        %500 = vmatpush.bf16.msra.mxu0 %v374
        %501 = vmatpush.bf16.msra.mxu0 %v371
        %502 = vmatpush.bf16.msra.mxu0 %v368
        %503 = vmatpush.bf16.msra.mxu0 %v365
        %504 = vmatpush.bf16.msra.mxu0 %v362
        %505 = vmatpush.bf16.msra.mxu0 %v359
        %506 = vmatpush.bf16.msra.mxu0 %v356
        %507 = vmatmul.bf16.gmra.mxu0 %v491
        %v508 = vpop.f32.mrf.mxu0
        %v509 = vadd.f32 0.0, %v508
        %v510 = vpop.f32.mrf.mxu0
        %511 = vdwg.mxu0
        %512 = vmatpush.bf16.msra.mxu0 %v378
        %513 = vmatpush.bf16.msra.mxu0 %v375
        %514 = vmatpush.bf16.msra.mxu0 %v372
        %515 = vmatpush.bf16.msra.mxu0 %v369
        %516 = vmatpush.bf16.msra.mxu0 %v366
        %517 = vmatpush.bf16.msra.mxu0 %v363
        %518 = vmatpush.bf16.msra.mxu0 %v360
        %519 = vmatpush.bf16.msra.mxu0 %v357
        %520 = vmatmul.bf16.gmra.mxu0 %v491
        %v521 = vpop.f32.mrf.mxu0
        %v522 = vadd.f32 0.0, %v521
        %v523 = vpop.f32.mrf.mxu0
        %524 = vdwg.mxu0
        %525 = vmatpush.bf16.msra.mxu0 %v379
        %526 = vmatpush.bf16.msra.mxu0 %v376
        %527 = vmatpush.bf16.msra.mxu0 %v373
        %528 = vmatpush.bf16.msra.mxu0 %v370
        %529 = vmatpush.bf16.msra.mxu0 %v367
        %530 = vmatpush.bf16.msra.mxu0 %v364
        %531 = vmatpush.bf16.msra.mxu0 %v361
        %532 = vmatpush.bf16.msra.mxu0 %v358
        %533 = vmatmul.bf16.gmra.mxu0 %v491
        %v534 = vpop.f32.mrf.mxu0
        %v535 = vadd.f32 0.0, %v534
        %v536 = vpop.f32.mrf.mxu0
        %537 = vdwg.mxu0
        %v538 = vadd.f32 %v496, %v509
        %v539 = vxor.u32 %v538, 2147483648
        %v540 = vmul.f32 %v539, 1.442695
        %v541 = vpow.pop %v540
        %v542 = vadd.f32 %v541, 1.0
        %v543 = vrcp.pop %v542
        %v544 = vmul.f32 %v542, %v543
        %v545 = vsub.f32 1.0, %v544
        %v546 = vmul.f32 %v543, %v545
        %v547 = vadd.f32 %v543, %v546
        %vm548 = vweird.f32 %v542
        %vm549 = vweird.f32 %v543
        %vm550 = vmor %vm548, %vm549
        %v551 = vsel %vm550, %v543, %v547
        %v552 = vand.u32 2147483647, %v542
        %vm553 = vcmp.eq.f32.partialorder %v552, 8.507059e+37
        %v554 = vand.u32 %v542, 2147483648
        %v555 = vor.u32 1.1754944e-38, %v554
        %v556 = vsel %vm553, %v555, %v551
        %v557 = vmul.f32 1.0, %v556
        %v558 = vadd.f32 %v497, %v522
        %v559 = vxor.u32 %v558, 2147483648
        %v560 = vmul.f32 %v559, 1.442695
        %v561 = vpow.pop %v560
        %v562 = vadd.f32 %v561, 1.0
        %v563 = vrcp.pop %v562
        %v564 = vmul.f32 %v562, %v563
        %v565 = vsub.f32 1.0, %v564
        %v566 = vmul.f32 %v563, %v565
        %v567 = vadd.f32 %v563, %v566
        %vm568 = vweird.f32 %v562
        %vm569 = vweird.f32 %v563
        %vm570 = vmor %vm568, %vm569
        %v571 = vsel %vm570, %v563, %v567
        %v572 = vand.u32 2147483647, %v562
        %vm573 = vcmp.eq.f32.partialorder %v572, 8.507059e+37
        %v574 = vand.u32 %v562, 2147483648
        %v575 = vor.u32 1.1754944e-38, %v574
        %v576 = vsel %vm573, %v575, %v571
        %v577 = vmul.f32 1.0, %v576
        %v578 = vadd.f32 %v535, %v267
        %v579 = vmul.f32 %v557, %v578
        %v580 = vadd.f32 %v498, %v579
        %v581 = vtanh.pop %v580
        %v582 = vsub.f32 1.0, %v577
        %v583 = vmul.f32 %v582, %v581
        %v584 = vmul.f32 %v577, %v490
        %v585 = vadd.f32 %v583, %v584
        %v586 = vpack.c.bf16 %v585, %v585
        %s587 = scalar_lea.vmem %s226, 4
        %588 = vst [vmem:[%s587] sm:$0xf] %v586
        %s589 = scalar_lea.vmem %s217, 24
        %v590 = vld [vmem:[%s589] sm:$0xff]
        %v591 = vld [vmem:[%s589 + $0x8] sm:$0xf]
        %v592 = vunpack.c.l.bf16 %v590
        %v593 = vunpack.c.h.bf16 %v590
        %v594 = vunpack.c.l.bf16 %v591
        %595 = vmatpush.bf16.msra.mxu0 %v377
        %596 = vmatpush.bf16.msra.mxu0 %v374
        %597 = vmatpush.bf16.msra.mxu0 %v371
        %598 = vmatpush.bf16.msra.mxu0 %v368
        %599 = vmatpush.bf16.msra.mxu0 %v365
        %600 = vmatpush.bf16.msra.mxu0 %v362
        %601 = vmatpush.bf16.msra.mxu0 %v359
        %602 = vmatpush.bf16.msra.mxu0 %v356
        %603 = vmatmul.bf16.gmra.mxu0 %v586
        %v604 = vpop.f32.mrf.mxu0
        %v605 = vadd.f32 0.0, %v604
        %v606 = vpop.f32.mrf.mxu0
        %607 = vdwg.mxu0
        %608 = vmatpush.bf16.msra.mxu0 %v378
        %609 = vmatpush.bf16.msra.mxu0 %v375
        %610 = vmatpush.bf16.msra.mxu0 %v372
        %611 = vmatpush.bf16.msra.mxu0 %v369
        %612 = vmatpush.bf16.msra.mxu0 %v366
        %613 = vmatpush.bf16.msra.mxu0 %v363
        %614 = vmatpush.bf16.msra.mxu0 %v360
        %615 = vmatpush.bf16.msra.mxu0 %v357
        %616 = vmatmul.bf16.gmra.mxu0 %v586
        %v617 = vpop.f32.mrf.mxu0
        %v618 = vadd.f32 0.0, %v617
        %v619 = vpop.f32.mrf.mxu0
        %620 = vdwg.mxu0
        %621 = vmatpush.bf16.msra.mxu0 %v379
        %622 = vmatpush.bf16.msra.mxu0 %v376
        %623 = vmatpush.bf16.msra.mxu0 %v373
        %624 = vmatpush.bf16.msra.mxu0 %v370
        %625 = vmatpush.bf16.msra.mxu0 %v367
        %626 = vmatpush.bf16.msra.mxu0 %v364
        %627 = vmatpush.bf16.msra.mxu0 %v361
        %628 = vmatpush.bf16.msra.mxu0 %v358
        %629 = vmatmul.bf16.gmra.mxu0 %v586
        %v630 = vpop.f32.mrf.mxu0
        %v631 = vadd.f32 0.0, %v630
        %v632 = vpop.f32.mrf.mxu0
        %633 = vdwg.mxu0
        %v634 = vadd.f32 %v592, %v605
        %v635 = vxor.u32 %v634, 2147483648
        %v636 = vmul.f32 %v635, 1.442695
        %v637 = vpow.pop %v636
        %v638 = vadd.f32 %v637, 1.0
        %v639 = vrcp.pop %v638
        %v640 = vmul.f32 %v638, %v639
        %v641 = vsub.f32 1.0, %v640
        %v642 = vmul.f32 %v639, %v641
        %v643 = vadd.f32 %v639, %v642
        %vm644 = vweird.f32 %v638
        %vm645 = vweird.f32 %v639
        %vm646 = vmor %vm644, %vm645
        %v647 = vsel %vm646, %v639, %v643
        %v648 = vand.u32 2147483647, %v638
        %vm649 = vcmp.eq.f32.partialorder %v648, 8.507059e+37
        %v650 = vand.u32 %v638, 2147483648
        %v651 = vor.u32 1.1754944e-38, %v650
        %v652 = vsel %vm649, %v651, %v647
        %v653 = vmul.f32 1.0, %v652
        %v654 = vadd.f32 %v593, %v618
        %v655 = vxor.u32 %v654, 2147483648
        %v656 = vmul.f32 %v655, 1.442695
        %v657 = vpow.pop %v656
        %v658 = vadd.f32 %v657, 1.0
        %v659 = vrcp.pop %v658
        %v660 = vmul.f32 %v658, %v659
        %v661 = vsub.f32 1.0, %v660
        %v662 = vmul.f32 %v659, %v661
        %v663 = vadd.f32 %v659, %v662
        %vm664 = vweird.f32 %v658
        %vm665 = vweird.f32 %v659
        %vm666 = vmor %vm664, %vm665
        %v667 = vsel %vm666, %v659, %v663
        %v668 = vand.u32 2147483647, %v658
        %vm669 = vcmp.eq.f32.partialorder %v668, 8.507059e+37
        %v670 = vand.u32 %v658, 2147483648
        %v671 = vor.u32 1.1754944e-38, %v670
        %v672 = vsel %vm669, %v671, %v667
        %v673 = vmul.f32 1.0, %v672
        %v674 = vadd.f32 %v631, %v267
        %v675 = vmul.f32 %v653, %v674
        %v676 = vadd.f32 %v594, %v675
        %v677 = vtanh.pop %v676
        %v678 = vsub.f32 1.0, %v673
        %v679 = vmul.f32 %v678, %v677
        %v680 = vmul.f32 %v673, %v585
        %v681 = vadd.f32 %v679, %v680
        %v682 = vpack.c.bf16 %v681, %v681
        %s683 = scalar_lea.vmem %s226, 8
        %684 = vst [vmem:[%s683] sm:$0xf] %v682
        %s685 = scalar_lea.vmem %s217, 36
        %v686 = vld [vmem:[%s685] sm:$0xff]
        %v687 = vld [vmem:[%s685 + $0x8] sm:$0xf]
        %v688 = vunpack.c.l.bf16 %v686
        %v689 = vunpack.c.h.bf16 %v686
        %v690 = vunpack.c.l.bf16 %v687
        %691 = vmatpush.bf16.msra.mxu0 %v377
        %692 = vmatpush.bf16.msra.mxu0 %v374
        %693 = vmatpush.bf16.msra.mxu0 %v371
        %694 = vmatpush.bf16.msra.mxu0 %v368
        %695 = vmatpush.bf16.msra.mxu0 %v365
        %696 = vmatpush.bf16.msra.mxu0 %v362
        %697 = vmatpush.bf16.msra.mxu0 %v359
        %698 = vmatpush.bf16.msra.mxu0 %v356
        %699 = vmatmul.bf16.gmra.mxu0 %v682
        %v700 = vpop.f32.mrf.mxu0
        %v701 = vadd.f32 0.0, %v700
        %v702 = vpop.f32.mrf.mxu0
        %703 = vdwg.mxu0
        %704 = vmatpush.bf16.msra.mxu0 %v378
        %705 = vmatpush.bf16.msra.mxu0 %v375
        %706 = vmatpush.bf16.msra.mxu0 %v372
        %707 = vmatpush.bf16.msra.mxu0 %v369
        %708 = vmatpush.bf16.msra.mxu0 %v366
        %709 = vmatpush.bf16.msra.mxu0 %v363
        %710 = vmatpush.bf16.msra.mxu0 %v360
        %711 = vmatpush.bf16.msra.mxu0 %v357
        %712 = vmatmul.bf16.gmra.mxu0 %v682
        %v713 = vpop.f32.mrf.mxu0
        %v714 = vadd.f32 0.0, %v713
        %v715 = vpop.f32.mrf.mxu0
        %716 = vdwg.mxu0
        %717 = vmatpush.bf16.msra.mxu0 %v379
        %718 = vmatpush.bf16.msra.mxu0 %v376
        %719 = vmatpush.bf16.msra.mxu0 %v373
        %720 = vmatpush.bf16.msra.mxu0 %v370
        %721 = vmatpush.bf16.msra.mxu0 %v367
        %722 = vmatpush.bf16.msra.mxu0 %v364
        %723 = vmatpush.bf16.msra.mxu0 %v361
        %724 = vmatpush.bf16.msra.mxu0 %v358
        %725 = vmatmul.bf16.gmra.mxu0 %v682
        %v726 = vpop.f32.mrf.mxu0
        %v727 = vadd.f32 0.0, %v726
        %v728 = vpop.f32.mrf.mxu0
        %729 = vdwg.mxu0
        %v730 = vadd.f32 %v688, %v701
        %v731 = vxor.u32 %v730, 2147483648
        %v732 = vmul.f32 %v731, 1.442695
        %v733 = vpow.pop %v732
        %v734 = vadd.f32 %v733, 1.0
        %v735 = vrcp.pop %v734
        %v736 = vmul.f32 %v734, %v735
        %v737 = vsub.f32 1.0, %v736
        %v738 = vmul.f32 %v735, %v737
        %v739 = vadd.f32 %v735, %v738
        %vm740 = vweird.f32 %v734
        %vm741 = vweird.f32 %v735
        %vm742 = vmor %vm740, %vm741
        %v743 = vsel %vm742, %v735, %v739
        %v744 = vand.u32 2147483647, %v734
        %vm745 = vcmp.eq.f32.partialorder %v744, 8.507059e+37
        %v746 = vand.u32 %v734, 2147483648
        %v747 = vor.u32 1.1754944e-38, %v746
        %v748 = vsel %vm745, %v747, %v743
        %v749 = vmul.f32 1.0, %v748
        %v750 = vadd.f32 %v689, %v714
        %v751 = vxor.u32 %v750, 2147483648
        %v752 = vmul.f32 %v751, 1.442695
        %v753 = vpow.pop %v752
        %v754 = vadd.f32 %v753, 1.0
        %v755 = vrcp.pop %v754
        %v756 = vmul.f32 %v754, %v755
        %v757 = vsub.f32 1.0, %v756
        %v758 = vmul.f32 %v755, %v757
        %v759 = vadd.f32 %v755, %v758
        %vm760 = vweird.f32 %v754
        %vm761 = vweird.f32 %v755
        %vm762 = vmor %vm760, %vm761
        %v763 = vsel %vm762, %v755, %v759
        %v764 = vand.u32 2147483647, %v754
        %vm765 = vcmp.eq.f32.partialorder %v764, 8.507059e+37
        %v766 = vand.u32 %v754, 2147483648
        %v767 = vor.u32 1.1754944e-38, %v766
        %v768 = vsel %vm765, %v767, %v763
        %v769 = vmul.f32 1.0, %v768
        %v770 = vadd.f32 %v727, %v267
        %v771 = vmul.f32 %v749, %v770
        %v772 = vadd.f32 %v690, %v771
        %v773 = vtanh.pop %v772
        %v774 = vsub.f32 1.0, %v769
        %v775 = vmul.f32 %v774, %v773
        %v776 = vmul.f32 %v769, %v681
        %v777 = vadd.f32 %v775, %v776
        %v778 = vpack.c.bf16 %v777, %v777
        %s779 = scalar_lea.vmem %s226, 12
        %780 = vst [vmem:[%s779] sm:$0xf] %v778
        %781 = vst [vmem:[#allocation2] sm:$0xff] %v777
        %s782 = smul.u32 4, %s20
        %p783 = scmp.lt.s32.totalorder %s782, 7
        %s784 = scalar_select %p783, %s782, 7
        %p785 = scmp.lt.s32.totalorder %s19, 0
        %s786 = scalar_select %p785, %s19, 0
        %s787 = sadd.s32 %s786, %s784
        %s788 = smul.addr %s787, 4
        %s789 = scalar_lea.vmem %s3, %s788
        // Predicated region
        $region41: #{encoder_rnn_forward.2} parent=31 // pred_check
          %p790 = pneg %p117
        $region42: #{encoder_rnn_forward.2} parent=31 // pred_check_branch
          %792 = sbr.rel (%p790) target = $region44
        $region43: #{encoder_rnn_forward.2} parent=31 // pred_region
          %s793 = smul.u32 4, %s20
        $region44: #{encoder_rnn_forward.2} parent=31 // pred_fallthru
          _
      $region32: #{encoder_rnn_forward.2} parent=5 // pred_fallthru
        _
      %p794 = scmp.le.s32.totalorder 2, %s10
      // Predicated region
      $region45: #{encoder_rnn_forward.2} parent=5 // pred_check
        %p795 = pneg %p794
      $region46: #{encoder_rnn_forward.2} parent=5 // pred_check_branch
        %797 = sbr.rel (%p795) target = $region48
      $region47: #{encoder_rnn_forward.2} parent=5 // pred_region
        %s798 = ssub.s32 %s10, 2
        // Predicated region
        $region49: #{encoder_rnn_forward.2} parent=47 // pred_check
          %p799 = pneg %p123
        $region50: #{encoder_rnn_forward.2} parent=47 // pred_check_branch
          %801 = sbr.rel (%p799) target = $region52
        $region51: #{encoder_rnn_forward.2} parent=47 // pred_region
          %s802 = smul.u32 4, %s22
          %p803 = scmp.lt.s32.totalorder %s802, 7
          %s804 = scalar_select %p803, %s802, 7
          %p805 = scmp.lt.s32.totalorder %s21, 0
          %s806 = scalar_select %p805, %s21, 0
          %s807 = sadd.s32 %s806, %s804
          %s808 = smul.addr %s807, 4
          %s809 = scalar_lea.vmem %s3, %s808
        $region52: #{encoder_rnn_forward.2} parent=47 // pred_fallthru
          _
      $region48: #{encoder_rnn_forward.2} parent=5 // pred_fallthru
        _
    $region6: #{encoder_rnn_forward.2} parent=1 // loop_footer
      %s14 = sadd.s32 1, %s10
    $region7: #{encoder_rnn_forward.2} parent=1 // loop_footer_branch
      %9 = sbr.rel target = $region3
    $region8: #{encoder_rnn_forward.2} parent=1 // loop_exit
      _
    %810 = vsyncpa [#allocation4], 1
    %s811 = scalar_lea.sflag [#allocation4], 1
    %812 = vsyncpa %s811, 1

// kernel: encoder_rnn_forward.3
$region0: #{encoder_rnn_forward.3}
  #allocation0 [shape = 'u32[]', space=smem, size = 0x4, offset = 0x4, fixed_abs, tag = 'smem constant byte address 0x4 - core index']
  #allocation1 [shape = 'u32[72,128]{1,0:T(1,128)}', space=vmem, size = 0x9000, scoped, tag = 'internal scratch']
  #allocation2 [shape = 'f32[8,128]{1,0:T(8,128)}', space=vmem, size = 0x1000, scoped, tag = 'scratch operand']
  %s0 = inlined_call_operand.vmem [shape: bf16[8,8,384], index: 0, kind: input, shape index: {}]
  %s1 = inlined_call_operand.vmem [shape: bf16[128,384], index: 1, kind: input, shape index: {}]
  %s2 = inlined_call_operand.vmem [shape: f32[1,128], index: 2, kind: input, shape index: {}]
  %s3 = inlined_call_operand.vmem [shape: bf16[8,8,128], index: 3, kind: output, shape index: {}]
  %s4 = sld [smem:[#allocation0]]
  $region49: #{encoder_rnn_forward.3} parent=0
    _
  %s6 = ssub.s32 1, %s4
  %s7 = scalar_select 0, %s6, %s4
  loop: start=0, step=1, limit=4
  $region2: #{encoder_rnn_forward.3} parent=0 // loop_pre_header
    _
  $region3: #{encoder_rnn_forward.3} parent=0 // loop_header
    %s9 = sphi 0, %s13
    %p10 = scmp.ge.s32.totalorder %s9, 4
    %s16 = sphi 0, %s28
    %s17 = sphi 0, %s24
    %s18 = sphi 0, %s16
    %s19 = sphi 0, %s17
    %s20 = sphi 0, %s18
    %s21 = sphi 0, %s19
    %s33 = sphi 0, %s35
    %s36 = sphi 0, %s33
    %s37 = sphi 0, %s36
    %s53 = sphi 0, %s37
    %s57 = sphi 0, %s57
    %s59 = sphi 0, %s57
    %s60 = sphi 0, %s59
    %s74 = sphi 0, %s60
    %s78 = sphi 0, %s78
    %s80 = sphi 0, %s78
    %s81 = sphi 0, %s80
    %s95 = sphi 0, %s81
    %s103 = sphi 0, %s105
    %s106 = sphi 0, %s103
    %s107 = sphi 0, %s106
    %s123 = sphi 0, %s107
  $region4: #{encoder_rnn_forward.3} parent=0 // loop_header_branch
    %12 = sbr.rel (%p10) target = $region8
  $region5: #{encoder_rnn_forward.3} parent=0 // loop_body
    %s14 = ssub.s32 %s9, 1
    %s15 = ssub.s32 %s9, 2
    %s22 = sadd.s32 1, %s17
    %p23 = scmp.ge.s32.totalorder %s22, 2
    %s24 = scalar_select %p23, 0, %s22
    %s25 = sadd.s32 1, %s16
    %s26 = scalar_select %p23, %s25, %s16
    %p27 = scmp.ge.s32.totalorder %s26, 1
    %s28 = scalar_select %p27, 0, %s26
    %s29 = ssub.s32 %s17, %s24
    %s30 = ssub.s32 %s16, %s28
    %s31 = sor.u32 %s29, %s30
    %p32 = scmp.eq.s32.totalorder %s31, 0
    %s34 = sadd.s32 %s33, 1
    %s35 = scalar_select %p32, %s33, %s34
    %p38 = pneg %p32
    %p39 = scmp.eq.s32.totalorder %s9, 1
    %p40 = por %p38, %p39
    %p41 = scmp.ne.s32.totalorder %s33, %s36
    %p42 = scmp.eq.s32.totalorder %s9, 0
    %p43 = por %p41, %p42
    %p44 = scmp.ne.s32.totalorder %s33, %s36
    %p45 = scmp.eq.s32.totalorder %s14, 1
    %p46 = por %p44, %p45
    %p47 = scmp.ne.s32.totalorder %s36, %s37
    %p48 = scmp.eq.s32.totalorder %s14, 0
    %p49 = por %p47, %p48
    %p50 = scmp.ne.s32.totalorder %s36, %s37
    %p51 = scmp.eq.s32.totalorder %s15, 1
    %p52 = por %p50, %p51
    %p54 = scmp.ne.s32.totalorder %s37, %s53
    %p55 = scmp.eq.s32.totalorder %s15, 0
    %p56 = por %p54, %p55
    %s58 = sadd.s32 %s57, 1
    %p61 = scmp.eq.s32.totalorder %s9, 1
    %p62 = scmp.ne.s32.totalorder %s57, %s59
    %p63 = scmp.eq.s32.totalorder %s9, 0
    %p64 = por %p62, %p63
    %p65 = scmp.ne.s32.totalorder %s57, %s59
    %p66 = scmp.eq.s32.totalorder %s14, 1
    %p67 = por %p65, %p66
    %p68 = scmp.ne.s32.totalorder %s59, %s60
    %p69 = scmp.eq.s32.totalorder %s14, 0
    %p70 = por %p68, %p69
    %p71 = scmp.ne.s32.totalorder %s59, %s60
    %p72 = scmp.eq.s32.totalorder %s15, 1
    %p73 = por %p71, %p72
    %p75 = scmp.ne.s32.totalorder %s60, %s74
    %p76 = scmp.eq.s32.totalorder %s15, 0
    %p77 = por %p75, %p76
    %s79 = sadd.s32 %s78, 1
    %p82 = scmp.eq.s32.totalorder %s9, 1
    %p83 = scmp.ne.s32.totalorder %s78, %s80
    %p84 = scmp.eq.s32.totalorder %s9, 0
    %p85 = por %p83, %p84
    %p86 = scmp.ne.s32.totalorder %s78, %s80
    %p87 = scmp.eq.s32.totalorder %s14, 1
    %p88 = por %p86, %p87
    %p89 = scmp.ne.s32.totalorder %s80, %s81
    %p90 = scmp.eq.s32.totalorder %s14, 0
    %p91 = por %p89, %p90
    %p92 = scmp.ne.s32.totalorder %s80, %s81
    %p93 = scmp.eq.s32.totalorder %s15, 1
    %p94 = por %p92, %p93
    %p96 = scmp.ne.s32.totalorder %s81, %s95
    %p97 = scmp.eq.s32.totalorder %s15, 0
    %p98 = por %p96, %p97
    %s99 = ssub.s32 %s17, %s24
    %s100 = ssub.s32 %s16, %s28
    %s101 = sor.u32 %s99, %s100
    %p102 = scmp.eq.s32.totalorder %s101, 0
    %s104 = sadd.s32 %s103, 1
    %s105 = scalar_select %p102, %s103, %s104
    %p108 = pneg %p102
    %p109 = scmp.eq.s32.totalorder %s9, 1
    %p110 = por %p108, %p109
    %p111 = scmp.ne.s32.totalorder %s103, %s106
    %p112 = scmp.eq.s32.totalorder %s9, 0
    %p113 = por %p111, %p112
    %p114 = scmp.ne.s32.totalorder %s103, %s106
    %p115 = scmp.eq.s32.totalorder %s14, 1
    %p116 = por %p114, %p115
    %p117 = scmp.ne.s32.totalorder %s106, %s107
    %p118 = scmp.eq.s32.totalorder %s14, 0
    %p119 = por %p117, %p118
    %p120 = scmp.ne.s32.totalorder %s106, %s107
    %p121 = scmp.eq.s32.totalorder %s15, 1
    %p122 = por %p120, %p121
    %p124 = scmp.ne.s32.totalorder %s107, %s123
    %p125 = scmp.eq.s32.totalorder %s15, 0
    %p126 = por %p124, %p125
    %p127 = scmp.le.s32.totalorder 1, %s9
    %p128 = scmp.lt.s32.totalorder %s9, 3
    %p129 = pnand %p127, %p128
    %p130 = pneg %p129
    // Predicated region
    $region9: #{encoder_rnn_forward.3} parent=5 // pred_check
      _
    $region10: #{encoder_rnn_forward.3} parent=5 // pred_check_branch
      %132 = sbr.rel (%p129) target = $region12
    $region11: #{encoder_rnn_forward.3} parent=5 // pred_region
      %s133 = ssub.s32 %s9, 1
      // Predicated region
      $region13: #{encoder_rnn_forward.3} parent=11 // pred_check
        %p134 = pneg %p70
      $region14: #{encoder_rnn_forward.3} parent=11 // pred_check_branch
        %136 = sbr.rel (%p134) target = $region16
      $region15: #{encoder_rnn_forward.3} parent=11 // pred_region
        _
      $region16: #{encoder_rnn_forward.3} parent=11 // pred_fallthru
        _
      // Predicated region
      $region17: #{encoder_rnn_forward.3} parent=11 // pred_check
        %p137 = pneg %p91
      $region18: #{encoder_rnn_forward.3} parent=11 // pred_check_branch
        %139 = sbr.rel (%p137) target = $region20
      $region19: #{encoder_rnn_forward.3} parent=11 // pred_region
        _
      $region20: #{encoder_rnn_forward.3} parent=11 // pred_fallthru
        _
    $region12: #{encoder_rnn_forward.3} parent=5 // pred_fallthru
      _
    %p140 = scmp.lt.s32.totalorder %s9, 2
    // Predicated region
    $region21: #{encoder_rnn_forward.3} parent=5 // pred_check
      %p141 = pneg %p140
    $region22: #{encoder_rnn_forward.3} parent=5 // pred_check_branch
      %143 = sbr.rel (%p141) target = $region24
    $region23: #{encoder_rnn_forward.3} parent=5 // pred_region
      // Predicated region
      $region25: #{encoder_rnn_forward.3} parent=23 // pred_check
        %p144 = pneg %p43
      $region26: #{encoder_rnn_forward.3} parent=23 // pred_check_branch
        %146 = sbr.rel (%p144) target = $region28
      $region27: #{encoder_rnn_forward.3} parent=23 // pred_region
        %s147 = smul.u32 4, %s17
        %p148 = scmp.lt.s32.totalorder %s147, 7
        %s149 = scalar_select %p148, %s147, 7
        %p150 = scmp.lt.s32.totalorder %s16, 0
        %s151 = scalar_select %p150, %s16, 0
        %s152 = smul.addr %s151, 3
        %s153 = smul.addr %s149, 3
        %s154 = sadd.s32 %s152, %s153
        %s155 = smul.addr %s154, 4
        %s156 = scalar_lea.vmem %s0, %s155
        %s157 = smul.u32 4, %s17
      $region28: #{encoder_rnn_forward.3} parent=23 // pred_fallthru
        _
    $region24: #{encoder_rnn_forward.3} parent=5 // pred_fallthru
      _
    %p158 = scmp.le.s32.totalorder 1, %s9
    %p159 = scmp.lt.s32.totalorder %s9, 3
    %p160 = pnand %p158, %p159
    %p161 = pneg %p160
    // Predicated region
    $region29: #{encoder_rnn_forward.3} parent=5 // pred_check
      _
    $region30: #{encoder_rnn_forward.3} parent=5 // pred_check_branch
      %163 = sbr.rel (%p160) target = $region32
    $region31: #{encoder_rnn_forward.3} parent=5 // pred_region
      %s164 = ssub.s32 %s9, 1
      %s165 = smul.u32 4, %s19
      %p166 = scmp.lt.s32.totalorder %s165, 7
      %s167 = scalar_select %p166, %s165, 7
      %p168 = scmp.lt.s32.totalorder %s18, 0
      %s169 = scalar_select %p168, %s18, 0
      %s170 = smul.addr %s169, 3
      %s171 = smul.addr %s167, 3
      %s172 = sadd.s32 %s170, %s171
      %s173 = smul.addr %s172, 4
      %s174 = scalar_lea.vmem %s0, %s173
      %p175 = pneg %p49
      %p176 = pneg %p46
      %p177 = pneg %p70
      %p178 = pneg %p67
      %p179 = pneg %p91
      %p180 = pneg %p88
      %p181 = pneg %p119
      %p182 = pneg %p116
      %s183 = smul.u32 4, %s19
      %p184 = scmp.lt.s32.totalorder %s183, 7
      %s185 = scalar_select %p184, %s183, 7
      %p186 = scmp.lt.s32.totalorder %s18, 0
      %s187 = scalar_select %p186, %s18, 0
      %s188 = sadd.s32 %s187, %s185
      %s189 = smul.addr %s188, 4
      %s190 = scalar_lea.vmem %s3, %s189
      %s191 = smul.u32 4, %s19
      %p192 = scmp.lt.s32.totalorder %s191, 7
      %s193 = scalar_select %p192, %s191, 7
      %p194 = scmp.lt.s32.totalorder %s18, 0
      %s195 = scalar_select %p194, %s18, 0
      %s196 = smul.addr %s195, 3
      %s197 = smul.addr %s193, 3
      %s198 = sadd.s32 %s196, %s197
      %s199 = smul.addr %s198, 4
      %s200 = scalar_lea.vmem %s0, %s199
      %s201 = smul.u32 4, %s19
      %s202 = smul.u32 4, %s19
      %p203 = scmp.lt.s32.totalorder %s202, 7
      %s204 = scalar_select %p203, %s202, 7
      %p205 = scmp.lt.s32.totalorder %s18, 0
      %s206 = scalar_select %p205, %s18, 0
      %s207 = sadd.s32 %s206, %s204
      %s208 = smul.addr %s207, 4
      %s209 = scalar_lea.vmem %s3, %s208
      %s210 = smul.u32 4, %s19
      %p211 = scmp.eq.s32.totalorder %s19, 0
      // Predicated region
      $region33: #{encoder_rnn_forward.3} parent=31 // pred_check
        %p212 = pneg %p211
      $region34: #{encoder_rnn_forward.3} parent=31 // pred_check_branch
        %214 = sbr.rel (%p212) target = $region36
      $region35: #{encoder_rnn_forward.3} parent=31 // pred_region
        %215 = vst [vmem:[#allocation2] sm:$0xff] 0.0
      $region36: #{encoder_rnn_forward.3} parent=31 // pred_fallthru
        _
      %v216 = vld [vmem:[%s1] sm:$0xff]
      %v217 = vld [vmem:[%s1 + $0x8] sm:$0xf]
      %v218 = vld [vmem:[%s1 + $0xc] sm:$0xff]
      %v219 = vld [vmem:[%s1 + $0x14] sm:$0xf]
      %v220 = vld [vmem:[%s1 + $0x18] sm:$0xff]
      %v221 = vld [vmem:[%s1 + $0x20] sm:$0xf]
      %v222 = vld [vmem:[%s1 + $0x24] sm:$0xff]
      %v223 = vld [vmem:[%s1 + $0x2c] sm:$0xf]
      %v224 = vld [vmem:[%s1 + $0x30] sm:$0xff]
      %v225 = vld [vmem:[%s1 + $0x38] sm:$0xf]
      %v226 = vld [vmem:[%s1 + $0x3c] sm:$0xff]
      %v227 = vld [vmem:[%s1 + $0x44] sm:$0xf]
      %v228 = vld [vmem:[%s1 + $0x48] sm:$0xff]
      %v229 = vld [vmem:[%s1 + $0x50] sm:$0xf]
      %v230 = vld [vmem:[%s1 + $0x54] sm:$0xff]
      %v231 = vld [vmem:[%s1 + $0x5c] sm:$0xf]
      %v232 = vld [vmem:[%s1 + $0x60] sm:$0xff]
      %v233 = vld [vmem:[%s1 + $0x68] sm:$0xf]
      %v234 = vld [vmem:[%s1 + $0x6c] sm:$0xff]
      %v235 = vld [vmem:[%s1 + $0x74] sm:$0xf]
      %v236 = vld [vmem:[%s1 + $0x78] sm:$0xff]
      %v237 = vld [vmem:[%s1 + $0x80] sm:$0xf]
      %v238 = vld [vmem:[%s1 + $0x84] sm:$0xff]
      %v239 = vld [vmem:[%s1 + $0x8c] sm:$0xf]
      %v240 = vld [vmem:[%s1 + $0x90] sm:$0xff]
      %v241 = vld [vmem:[%s1 + $0x98] sm:$0xf]
      %v242 = vld [vmem:[%s1 + $0x9c] sm:$0xff]
      %v243 = vld [vmem:[%s1 + $0xa4] sm:$0xf]
      %v244 = vld [vmem:[%s1 + $0xa8] sm:$0xff]
      %v245 = vld [vmem:[%s1 + $0xb0] sm:$0xf]
      %v246 = vld [vmem:[%s1 + $0xb4] sm:$0xff]
      %v247 = vld [vmem:[%s1 + $0xbc] sm:$0xf]
      %v248 = vld [vmem:[%s2] sm:$0x1]
      %v250 = vperm.slane %v248, 0
      %v252 = vld [vmem:[#allocation2] sm:$0xff]
      %v253 = vld [vmem:[%s200] sm:$0xff]
      %v254 = vld [vmem:[%s200 + $0x8] sm:$0xf]
      %v255 = vunpack.c.l.bf16 %v253
      %v256 = vunpack.c.h.bf16 %v253
      %v257 = vunpack.c.l.bf16 %v254
      %v258 = vpack.c.bf16 %v252, %v252
      %v291 = vunpack.c.l.b16 %v216
      %v292 = vunpack.c.h.b16 %v216
      %v293 = vunpack.c.l.b16 %v217
      %v294 = vunpack.c.l.b16 %v218
      %v295 = vunpack.c.h.b16 %v218
      %v296 = vunpack.c.l.b16 %v219
      %v297 = vunpack.c.l.b16 %v220
      %v298 = vunpack.c.h.b16 %v220
      %v299 = vunpack.c.l.b16 %v221
      %v300 = vunpack.c.l.b16 %v222
      %v301 = vunpack.c.h.b16 %v222
      %v302 = vunpack.c.l.b16 %v223
      %v303 = vunpack.c.l.b16 %v224
      %v304 = vunpack.c.h.b16 %v224
      %v305 = vunpack.c.l.b16 %v225
      %v306 = vunpack.c.l.b16 %v226
      %v307 = vunpack.c.h.b16 %v226
      %v308 = vunpack.c.l.b16 %v227
      %v309 = vunpack.c.l.b16 %v228
      %v310 = vunpack.c.h.b16 %v228
      %v311 = vunpack.c.l.b16 %v229
      %v312 = vunpack.c.l.b16 %v230
      %v313 = vunpack.c.h.b16 %v230
      %v314 = vunpack.c.l.b16 %v231
      %v315 = vunpack.c.l.b16 %v232
      %v316 = vunpack.c.h.b16 %v232
      %v317 = vunpack.c.l.b16 %v233
      %v318 = vunpack.c.l.b16 %v234
      %v319 = vunpack.c.h.b16 %v234
      %v320 = vunpack.c.l.b16 %v235
      %v321 = vunpack.c.l.b16 %v236
      %v322 = vunpack.c.h.b16 %v236
      %v323 = vunpack.c.l.b16 %v237
      %v324 = vunpack.c.l.b16 %v238
      %v325 = vunpack.c.h.b16 %v238
      %v326 = vunpack.c.l.b16 %v239
      %v327 = vunpack.c.l.b16 %v240
      %v328 = vunpack.c.h.b16 %v240
      %v329 = vunpack.c.l.b16 %v241
      %v330 = vunpack.c.l.b16 %v242
      %v331 = vunpack.c.h.b16 %v242
      %v332 = vunpack.c.l.b16 %v243
      %v333 = vunpack.c.l.b16 %v244
      %v334 = vunpack.c.h.b16 %v244
      %v335 = vunpack.c.l.b16 %v245
      %v336 = vunpack.c.l.b16 %v246
      %v337 = vunpack.c.h.b16 %v246
      %v338 = vunpack.c.l.b16 %v247
      %v339 = vpack.c.b16 %v294, %v291
      %v340 = vpack.c.b16 %v295, %v292
      %v341 = vpack.c.b16 %v296, %v293
      %v342 = vpack.c.b16 %v300, %v297
      %v343 = vpack.c.b16 %v301, %v298
      %v344 = vpack.c.b16 %v302, %v299
      %v345 = vpack.c.b16 %v306, %v303
      %v346 = vpack.c.b16 %v307, %v304
      %v347 = vpack.c.b16 %v308, %v305
      %v348 = vpack.c.b16 %v312, %v309
      %v349 = vpack.c.b16 %v313, %v310
      %v350 = vpack.c.b16 %v314, %v311
      %v351 = vpack.c.b16 %v318, %v315
      %v352 = vpack.c.b16 %v319, %v316
      %v353 = vpack.c.b16 %v320, %v317
      %v354 = vpack.c.b16 %v324, %v321
      %v355 = vpack.c.b16 %v325, %v322
      %v356 = vpack.c.b16 %v326, %v323
      %v357 = vpack.c.b16 %v330, %v327
      %v358 = vpack.c.b16 %v331, %v328
      %v359 = vpack.c.b16 %v332, %v329
      %v360 = vpack.c.b16 %v336, %v333
      %v361 = vpack.c.b16 %v337, %v334
      %v362 = vpack.c.b16 %v338, %v335
      %387 = vmatpush.bf16.msra.mxu0 %v360
      %388 = vmatpush.bf16.msra.mxu0 %v357
      %389 = vmatpush.bf16.msra.mxu0 %v354
      %390 = vmatpush.bf16.msra.mxu0 %v351
      %391 = vmatpush.bf16.msra.mxu0 %v348
      %392 = vmatpush.bf16.msra.mxu0 %v345
      %393 = vmatpush.bf16.msra.mxu0 %v342
      %394 = vmatpush.bf16.msra.mxu0 %v339
      %395 = vmatmul.bf16.gmra.mxu0 %v258
      %v396 = vpop.f32.mrf.mxu0
      %v397 = vadd.f32 0.0, %v396
      %v398 = vpop.f32.mrf.mxu0
      %399 = vdwg.mxu0
      %400 = vmatpush.bf16.msra.mxu0 %v361
      %401 = vmatpush.bf16.msra.mxu0 %v358
      %402 = vmatpush.bf16.msra.mxu0 %v355
      %403 = vmatpush.bf16.msra.mxu0 %v352
      %404 = vmatpush.bf16.msra.mxu0 %v349
      %405 = vmatpush.bf16.msra.mxu0 %v346
      %406 = vmatpush.bf16.msra.mxu0 %v343
      %407 = vmatpush.bf16.msra.mxu0 %v340
      %408 = vmatmul.bf16.gmra.mxu0 %v258
      %v409 = vpop.f32.mrf.mxu0
      %v410 = vadd.f32 0.0, %v409
      %v411 = vpop.f32.mrf.mxu0
      %412 = vdwg.mxu0
      %413 = vmatpush.bf16.msra.mxu0 %v362
      %414 = vmatpush.bf16.msra.mxu0 %v359
      %415 = vmatpush.bf16.msra.mxu0 %v356
      %416 = vmatpush.bf16.msra.mxu0 %v353
      %417 = vmatpush.bf16.msra.mxu0 %v350
      %418 = vmatpush.bf16.msra.mxu0 %v347
      %419 = vmatpush.bf16.msra.mxu0 %v344
      %420 = vmatpush.bf16.msra.mxu0 %v341
      %421 = vmatmul.bf16.gmra.mxu0 %v258
      %v422 = vpop.f32.mrf.mxu0
      %v423 = vadd.f32 0.0, %v422
      %v424 = vpop.f32.mrf.mxu0
      %425 = vdwg.mxu0
      %v426 = vadd.f32 %v255, %v397
      %v427 = vxor.u32 %v426, 2147483648
      %v428 = vmul.f32 %v427, 1.442695
      %v429 = vpow.pop %v428
      %v430 = vadd.f32 %v429, 1.0
      %v431 = vrcp.pop %v430
      %v432 = vmul.f32 %v430, %v431
      %v433 = vsub.f32 1.0, %v432
      %v434 = vmul.f32 %v431, %v433
      %v435 = vadd.f32 %v431, %v434
      %vm436 = vweird.f32 %v430
      %vm437 = vweird.f32 %v431
      %vm438 = vmor %vm436, %vm437
      %v439 = vsel %vm438, %v431, %v435
      %v440 = vand.u32 2147483647, %v430
      %vm441 = vcmp.eq.f32.partialorder %v440, 8.507059e+37
      %v442 = vand.u32 %v430, 2147483648
      %v443 = vor.u32 1.1754944e-38, %v442
      %v444 = vsel %vm441, %v443, %v439
      %v445 = vmul.f32 1.0, %v444
      %v446 = vadd.f32 %v256, %v410
      %v447 = vxor.u32 %v446, 2147483648
      %v448 = vmul.f32 %v447, 1.442695
      %v449 = vpow.pop %v448
      %v450 = vadd.f32 %v449, 1.0
      %v451 = vrcp.pop %v450
      %v452 = vmul.f32 %v450, %v451
      %v453 = vsub.f32 1.0, %v452
      %v454 = vmul.f32 %v451, %v453
      %v455 = vadd.f32 %v451, %v454
      %vm456 = vweird.f32 %v450
      %vm457 = vweird.f32 %v451
      %vm458 = vmor %vm456, %vm457
      %v459 = vsel %vm458, %v451, %v455
      %v460 = vand.u32 2147483647, %v450
      %vm461 = vcmp.eq.f32.partialorder %v460, 8.507059e+37
      %v462 = vand.u32 %v450, 2147483648
      %v463 = vor.u32 1.1754944e-38, %v462
      %v464 = vsel %vm461, %v463, %v459
      %v465 = vmul.f32 1.0, %v464
      %v466 = vadd.f32 %v423, %v250
      %v467 = vmul.f32 %v445, %v466
      %v468 = vadd.f32 %v257, %v467
      %v469 = vtanh.pop %v468
      %v470 = vsub.f32 1.0, %v465
      %v471 = vmul.f32 %v470, %v469
      %v472 = vmul.f32 %v465, %v252
      %v473 = vadd.f32 %v471, %v472
      %v474 = vpack.c.bf16 %v473, %v473
      %475 = vst [vmem:[%s209] sm:$0xf] %v474
      %s476 = scalar_lea.vmem %s200, 12
      %v477 = vld [vmem:[%s476] sm:$0xff]
      %v478 = vld [vmem:[%s476 + $0x8] sm:$0xf]
      %v479 = vunpack.c.l.bf16 %v477
      %v480 = vunpack.c.h.bf16 %v477
      %v481 = vunpack.c.l.bf16 %v478
      %482 = vmatpush.bf16.msra.mxu0 %v360
      %483 = vmatpush.bf16.msra.mxu0 %v357
      %484 = vmatpush.bf16.msra.mxu0 %v354
      %485 = vmatpush.bf16.msra.mxu0 %v351
      %486 = vmatpush.bf16.msra.mxu0 %v348
      %487 = vmatpush.bf16.msra.mxu0 %v345
      %488 = vmatpush.bf16.msra.mxu0 %v342
      %489 = vmatpush.bf16.msra.mxu0 %v339
      %490 = vmatmul.bf16.gmra.mxu0 %v474
      %v491 = vpop.f32.mrf.mxu0
      %v492 = vadd.f32 0.0, %v491
      %v493 = vpop.f32.mrf.mxu0
      %494 = vdwg.mxu0
      %495 = vmatpush.bf16.msra.mxu0 %v361
      %496 = vmatpush.bf16.msra.mxu0 %v358
      %497 = vmatpush.bf16.msra.mxu0 %v355
      %498 = vmatpush.bf16.msra.mxu0 %v352
      %499 = vmatpush.bf16.msra.mxu0 %v349
      %500 = vmatpush.bf16.msra.mxu0 %v346
      %501 = vmatpush.bf16.msra.mxu0 %v343
      %502 = vmatpush.bf16.msra.mxu0 %v340
      %503 = vmatmul.bf16.gmra.mxu0 %v474
      %v504 = vpop.f32.mrf.mxu0
      %v505 = vadd.f32 0.0, %v504
      %v506 = vpop.f32.mrf.mxu0
      %507 = vdwg.mxu0
      %508 = vmatpush.bf16.msra.mxu0 %v362
      %509 = vmatpush.bf16.msra.mxu0 %v359
      %510 = vmatpush.bf16.msra.mxu0 %v356
      %511 = vmatpush.bf16.msra.mxu0 %v353
      %512 = vmatpush.bf16.msra.mxu0 %v350
      %513 = vmatpush.bf16.msra.mxu0 %v347
      %514 = vmatpush.bf16.msra.mxu0 %v344
      %515 = vmatpush.bf16.msra.mxu0 %v341
      %516 = vmatmul.bf16.gmra.mxu0 %v474
      %v517 = vpop.f32.mrf.mxu0
      %v518 = vadd.f32 0.0, %v517
      %v519 = vpop.f32.mrf.mxu0
      %520 = vdwg.mxu0
      %v521 = vadd.f32 %v479, %v492
      %v522 = vxor.u32 %v521, 2147483648
      %v523 = vmul.f32 %v522, 1.442695
      %v524 = vpow.pop %v523
      %v525 = vadd.f32 %v524, 1.0
      %v526 = vrcp.pop %v525
      %v527 = vmul.f32 %v525, %v526
      %v528 = vsub.f32 1.0, %v527
      %v529 = vmul.f32 %v526, %v528
      %v530 = vadd.f32 %v526, %v529
      %vm531 = vweird.f32 %v525
      %vm532 = vweird.f32 %v526
      %vm533 = vmor %vm531, %vm532
      %v534 = vsel %vm533, %v526, %v530
      %v535 = vand.u32 2147483647, %v525
      %vm536 = vcmp.eq.f32.partialorder %v535, 8.507059e+37
      %v537 = vand.u32 %v525, 2147483648
      %v538 = vor.u32 1.1754944e-38, %v537
      %v539 = vsel %vm536, %v538, %v534
      %v540 = vmul.f32 1.0, %v539
      %v541 = vadd.f32 %v480, %v505
      %v542 = vxor.u32 %v541, 2147483648
      %v543 = vmul.f32 %v542, 1.442695
      %v544 = vpow.pop %v543
      %v545 = vadd.f32 %v544, 1.0
      %v546 = vrcp.pop %v545
      %v547 = vmul.f32 %v545, %v546
      %v548 = vsub.f32 1.0, %v547
      %v549 = vmul.f32 %v546, %v548
      %v550 = vadd.f32 %v546, %v549
      %vm551 = vweird.f32 %v545
      %vm552 = vweird.f32 %v546
      %vm553 = vmor %vm551, %vm552
      %v554 = vsel %vm553, %v546, %v550
      %v555 = vand.u32 2147483647, %v545
      %vm556 = vcmp.eq.f32.partialorder %v555, 8.507059e+37
      %v557 = vand.u32 %v545, 2147483648
      %v558 = vor.u32 1.1754944e-38, %v557
      %v559 = vsel %vm556, %v558, %v554
      %v560 = vmul.f32 1.0, %v559
      %v561 = vadd.f32 %v518, %v250
      %v562 = vmul.f32 %v540, %v561
      %v563 = vadd.f32 %v481, %v562
      %v564 = vtanh.pop %v563
      %v565 = vsub.f32 1.0, %v560
      %v566 = vmul.f32 %v565, %v564
      %v567 = vmul.f32 %v560, %v473
      %v568 = vadd.f32 %v566, %v567
      %v569 = vpack.c.bf16 %v568, %v568
      %s570 = scalar_lea.vmem %s209, 4
      %571 = vst [vmem:[%s570] sm:$0xf] %v569
      %s572 = scalar_lea.vmem %s200, 24
      %v573 = vld [vmem:[%s572] sm:$0xff]
      %v574 = vld [vmem:[%s572 + $0x8] sm:$0xf]
      %v575 = vunpack.c.l.bf16 %v573
      %v576 = vunpack.c.h.bf16 %v573
      %v577 = vunpack.c.l.bf16 %v574
      %578 = vmatpush.bf16.msra.mxu0 %v360
      %579 = vmatpush.bf16.msra.mxu0 %v357
      %580 = vmatpush.bf16.msra.mxu0 %v354
      %581 = vmatpush.bf16.msra.mxu0 %v351
      %582 = vmatpush.bf16.msra.mxu0 %v348
      %583 = vmatpush.bf16.msra.mxu0 %v345
      %584 = vmatpush.bf16.msra.mxu0 %v342
      %585 = vmatpush.bf16.msra.mxu0 %v339
      %586 = vmatmul.bf16.gmra.mxu0 %v569
      %v587 = vpop.f32.mrf.mxu0
      %v588 = vadd.f32 0.0, %v587
      %v589 = vpop.f32.mrf.mxu0
      %590 = vdwg.mxu0
      %591 = vmatpush.bf16.msra.mxu0 %v361
      %592 = vmatpush.bf16.msra.mxu0 %v358
      %593 = vmatpush.bf16.msra.mxu0 %v355
      %594 = vmatpush.bf16.msra.mxu0 %v352
      %595 = vmatpush.bf16.msra.mxu0 %v349
      %596 = vmatpush.bf16.msra.mxu0 %v346
      %597 = vmatpush.bf16.msra.mxu0 %v343
      %598 = vmatpush.bf16.msra.mxu0 %v340
      %599 = vmatmul.bf16.gmra.mxu0 %v569
      %v600 = vpop.f32.mrf.mxu0
      %v601 = vadd.f32 0.0, %v600
      %v602 = vpop.f32.mrf.mxu0
      %603 = vdwg.mxu0
      %604 = vmatpush.bf16.msra.mxu0 %v362
      %605 = vmatpush.bf16.msra.mxu0 %v359
      %606 = vmatpush.bf16.msra.mxu0 %v356
      %607 = vmatpush.bf16.msra.mxu0 %v353
      %608 = vmatpush.bf16.msra.mxu0 %v350
      %609 = vmatpush.bf16.msra.mxu0 %v347
      %610 = vmatpush.bf16.msra.mxu0 %v344
      %611 = vmatpush.bf16.msra.mxu0 %v341
      %612 = vmatmul.bf16.gmra.mxu0 %v569
      %v613 = vpop.f32.mrf.mxu0
      %v614 = vadd.f32 0.0, %v613
      %v615 = vpop.f32.mrf.mxu0
      %616 = vdwg.mxu0
      %v617 = vadd.f32 %v575, %v588
      %v618 = vxor.u32 %v617, 2147483648
      %v619 = vmul.f32 %v618, 1.442695
      %v620 = vpow.pop %v619
      %v621 = vadd.f32 %v620, 1.0
      %v622 = vrcp.pop %v621
      %v623 = vmul.f32 %v621, %v622
      %v624 = vsub.f32 1.0, %v623
      %v625 = vmul.f32 %v622, %v624
      %v626 = vadd.f32 %v622, %v625
      %vm627 = vweird.f32 %v621
      %vm628 = vweird.f32 %v622
      %vm629 = vmor %vm627, %vm628
      %v630 = vsel %vm629, %v622, %v626
      %v631 = vand.u32 2147483647, %v621
      %vm632 = vcmp.eq.f32.partialorder %v631, 8.507059e+37
      %v633 = vand.u32 %v621, 2147483648
      %v634 = vor.u32 1.1754944e-38, %v633
      %v635 = vsel %vm632, %v634, %v630
      %v636 = vmul.f32 1.0, %v635
      %v637 = vadd.f32 %v576, %v601
      %v638 = vxor.u32 %v637, 2147483648
      %v639 = vmul.f32 %v638, 1.442695
      %v640 = vpow.pop %v639
      %v641 = vadd.f32 %v640, 1.0
      %v642 = vrcp.pop %v641
      %v643 = vmul.f32 %v641, %v642
      %v644 = vsub.f32 1.0, %v643
      %v645 = vmul.f32 %v642, %v644
      %v646 = vadd.f32 %v642, %v645
      %vm647 = vweird.f32 %v641
      %vm648 = vweird.f32 %v642
      %vm649 = vmor %vm647, %vm648
      %v650 = vsel %vm649, %v642, %v646
      %v651 = vand.u32 2147483647, %v641
      %vm652 = vcmp.eq.f32.partialorder %v651, 8.507059e+37
      %v653 = vand.u32 %v641, 2147483648
      %v654 = vor.u32 1.1754944e-38, %v653
      %v655 = vsel %vm652, %v654, %v650
      %v656 = vmul.f32 1.0, %v655
      %v657 = vadd.f32 %v614, %v250
      %v658 = vmul.f32 %v636, %v657
      %v659 = vadd.f32 %v577, %v658
      %v660 = vtanh.pop %v659
      %v661 = vsub.f32 1.0, %v656
      %v662 = vmul.f32 %v661, %v660
      %v663 = vmul.f32 %v656, %v568
      %v664 = vadd.f32 %v662, %v663
      %v665 = vpack.c.bf16 %v664, %v664
      %s666 = scalar_lea.vmem %s209, 8
      %667 = vst [vmem:[%s666] sm:$0xf] %v665
      %s668 = scalar_lea.vmem %s200, 36
      %v669 = vld [vmem:[%s668] sm:$0xff]
      %v670 = vld [vmem:[%s668 + $0x8] sm:$0xf]
      %v671 = vunpack.c.l.bf16 %v669
      %v672 = vunpack.c.h.bf16 %v669
      %v673 = vunpack.c.l.bf16 %v670
      %674 = vmatpush.bf16.msra.mxu0 %v360
      %675 = vmatpush.bf16.msra.mxu0 %v357
      %676 = vmatpush.bf16.msra.mxu0 %v354
      %677 = vmatpush.bf16.msra.mxu0 %v351
      %678 = vmatpush.bf16.msra.mxu0 %v348
      %679 = vmatpush.bf16.msra.mxu0 %v345
      %680 = vmatpush.bf16.msra.mxu0 %v342
      %681 = vmatpush.bf16.msra.mxu0 %v339
      %682 = vmatmul.bf16.gmra.mxu0 %v665
      %v683 = vpop.f32.mrf.mxu0
      %v684 = vadd.f32 0.0, %v683
      %v685 = vpop.f32.mrf.mxu0
      %686 = vdwg.mxu0
      %687 = vmatpush.bf16.msra.mxu0 %v361
      %688 = vmatpush.bf16.msra.mxu0 %v358
      %689 = vmatpush.bf16.msra.mxu0 %v355
      %690 = vmatpush.bf16.msra.mxu0 %v352
      %691 = vmatpush.bf16.msra.mxu0 %v349
      %692 = vmatpush.bf16.msra.mxu0 %v346
      %693 = vmatpush.bf16.msra.mxu0 %v343
      %694 = vmatpush.bf16.msra.mxu0 %v340
      %695 = vmatmul.bf16.gmra.mxu0 %v665
      %v696 = vpop.f32.mrf.mxu0
      %v697 = vadd.f32 0.0, %v696
      %v698 = vpop.f32.mrf.mxu0
      %699 = vdwg.mxu0
      %700 = vmatpush.bf16.msra.mxu0 %v362
      %701 = vmatpush.bf16.msra.mxu0 %v359
      %702 = vmatpush.bf16.msra.mxu0 %v356
      %703 = vmatpush.bf16.msra.mxu0 %v353
      %704 = vmatpush.bf16.msra.mxu0 %v350
      %705 = vmatpush.bf16.msra.mxu0 %v347
      %706 = vmatpush.bf16.msra.mxu0 %v344
      %707 = vmatpush.bf16.msra.mxu0 %v341
      %708 = vmatmul.bf16.gmra.mxu0 %v665
      %v709 = vpop.f32.mrf.mxu0
      %v710 = vadd.f32 0.0, %v709
      %v711 = vpop.f32.mrf.mxu0
      %712 = vdwg.mxu0
      %v713 = vadd.f32 %v671, %v684
      %v714 = vxor.u32 %v713, 2147483648
      %v715 = vmul.f32 %v714, 1.442695
      %v716 = vpow.pop %v715
      %v717 = vadd.f32 %v716, 1.0
      %v718 = vrcp.pop %v717
      %v719 = vmul.f32 %v717, %v718
      %v720 = vsub.f32 1.0, %v719
      %v721 = vmul.f32 %v718, %v720
      %v722 = vadd.f32 %v718, %v721
      %vm723 = vweird.f32 %v717
      %vm724 = vweird.f32 %v718
      %vm725 = vmor %vm723, %vm724
      %v726 = vsel %vm725, %v718, %v722
      %v727 = vand.u32 2147483647, %v717
      %vm728 = vcmp.eq.f32.partialorder %v727, 8.507059e+37
      %v729 = vand.u32 %v717, 2147483648
      %v730 = vor.u32 1.1754944e-38, %v729
      %v731 = vsel %vm728, %v730, %v726
      %v732 = vmul.f32 1.0, %v731
      %v733 = vadd.f32 %v672, %v697
      %v734 = vxor.u32 %v733, 2147483648
      %v735 = vmul.f32 %v734, 1.442695
      %v736 = vpow.pop %v735
      %v737 = vadd.f32 %v736, 1.0
      %v738 = vrcp.pop %v737
      %v739 = vmul.f32 %v737, %v738
      %v740 = vsub.f32 1.0, %v739
      %v741 = vmul.f32 %v738, %v740
      %v742 = vadd.f32 %v738, %v741
      %vm743 = vweird.f32 %v737
      %vm744 = vweird.f32 %v738
      %vm745 = vmor %vm743, %vm744
      %v746 = vsel %vm745, %v738, %v742
      %v747 = vand.u32 2147483647, %v737
      %vm748 = vcmp.eq.f32.partialorder %v747, 8.507059e+37
      %v749 = vand.u32 %v737, 2147483648
      %v750 = vor.u32 1.1754944e-38, %v749
      %v751 = vsel %vm748, %v750, %v746
      %v752 = vmul.f32 1.0, %v751
      %v753 = vadd.f32 %v710, %v250
      %v754 = vmul.f32 %v732, %v753
      %v755 = vadd.f32 %v673, %v754
      %v756 = vtanh.pop %v755
      %v757 = vsub.f32 1.0, %v752
      %v758 = vmul.f32 %v757, %v756
      %v759 = vmul.f32 %v752, %v664
      %v760 = vadd.f32 %v758, %v759
      %v761 = vpack.c.bf16 %v760, %v760
      %s762 = scalar_lea.vmem %s209, 12
      %763 = vst [vmem:[%s762] sm:$0xf] %v761
      %764 = vst [vmem:[#allocation2] sm:$0xff] %v760
      %s765 = smul.u32 4, %s19
      %p766 = scmp.lt.s32.totalorder %s765, 7
      %s767 = scalar_select %p766, %s765, 7
      %p768 = scmp.lt.s32.totalorder %s18, 0
      %s769 = scalar_select %p768, %s18, 0
      %s770 = sadd.s32 %s769, %s767
      %s771 = smul.addr %s770, 4
      %s772 = scalar_lea.vmem %s3, %s771
      // Predicated region
      $region37: #{encoder_rnn_forward.3} parent=31 // pred_check
        %p773 = pneg %p116
      $region38: #{encoder_rnn_forward.3} parent=31 // pred_check_branch
        %775 = sbr.rel (%p773) target = $region40
      $region39: #{encoder_rnn_forward.3} parent=31 // pred_region
        %s776 = smul.u32 4, %s19
      $region40: #{encoder_rnn_forward.3} parent=31 // pred_fallthru
        _
    $region32: #{encoder_rnn_forward.3} parent=5 // pred_fallthru
      _
    %p777 = scmp.le.s32.totalorder 2, %s9
    // Predicated region
    $region41: #{encoder_rnn_forward.3} parent=5 // pred_check
      %p778 = pneg %p777
    $region42: #{encoder_rnn_forward.3} parent=5 // pred_check_branch
      %780 = sbr.rel (%p778) target = $region44
    $region43: #{encoder_rnn_forward.3} parent=5 // pred_region
      %s781 = ssub.s32 %s9, 2
      // Predicated region
      $region45: #{encoder_rnn_forward.3} parent=43 // pred_check
        %p782 = pneg %p122
      $region46: #{encoder_rnn_forward.3} parent=43 // pred_check_branch
        %784 = sbr.rel (%p782) target = $region48
      $region47: #{encoder_rnn_forward.3} parent=43 // pred_region
        %s785 = smul.u32 4, %s21
        %p786 = scmp.lt.s32.totalorder %s785, 7
        %s787 = scalar_select %p786, %s785, 7
        %p788 = scmp.lt.s32.totalorder %s20, 0
        %s789 = scalar_select %p788, %s20, 0
        %s790 = sadd.s32 %s789, %s787
        %s791 = smul.addr %s790, 4
        %s792 = scalar_lea.vmem %s3, %s791
      $region48: #{encoder_rnn_forward.3} parent=43 // pred_fallthru
        _
    $region44: #{encoder_rnn_forward.3} parent=5 // pred_fallthru
      _
  $region6: #{encoder_rnn_forward.3} parent=0 // loop_footer
    %s13 = sadd.s32 1, %s9
  $region7: #{encoder_rnn_forward.3} parent=0 // loop_footer_branch
    %8 = sbr.rel target = $region3
  $region8: #{encoder_rnn_forward.3} parent=0 // loop_exit
    _

</llo_original>
